<compile_context>
chip_gen: v6e
topology: v6e:2x2x1
jax: 0.10.0
libtpu: 0.0.40
codegen_flags: <defaults>
</compile_context>

<pallas_src>
import functools

import jax
import jax.numpy as jnp
import numpy as np
from jax.experimental import pallas as pl
from jax.experimental.pallas import tpu as pltpu


def _round_up(x, m):
    return ((x + m - 1) // m) * m


# -----------------------------------------------------------------------------
# Kernel
# -----------------------------------------------------------------------------
def _vae_kernel(x_ref, w1_ref, b1_ref, w2_ref, b2_ref, eps_ref,
                w3_ref, b3_ref, w4_ref, b4_ref,
                recon_ref, mu_ref, logvar_ref):
    f32 = jnp.float32
    cdt = w1_ref.dtype            # MXU compute dtype (bf16)
    zp = mu_ref.shape[-1]         # padded z dim, multiple of 128

    x = x_ref[...]

    # ---- encoder: Linear -> ReLU (MXU matmul, f32 accumulate; f32 VPU math) ----
    h1 = jnp.dot(x, w1_ref[...], preferred_element_type=f32) + b1_ref[...]
    h1 = jnp.maximum(h1, 0.0).astype(cdt)

    # ---- encoder head: ONE fused matmul over [mu | logvar]; N = 2*zp >= 256 ----
    enc = jnp.dot(h1, w2_ref[...], preferred_element_type=f32) + b2_ref[...]
    # torch.chunk(enc, 2, dim=1): slice at column zp -- a 128-lane boundary, so
    # both halves stay lane-dense and the output stores remain unmasked.
    mu = enc[:, :zp]
    logvar = enc[:, zp:]

    # ---- reparameterize: z = mu + eps * exp(0.5 * logvar)  (f32 EUP/VPU) ----
    std = jnp.exp(0.5 * logvar)
    z = (mu + eps_ref[...] * std).astype(cdt)

    # ---- decoder: Linear -> ReLU -> Linear ----
    h2 = jnp.dot(z, w3_ref[...], preferred_element_type=f32) + b3_ref[...]
    h2 = jnp.maximum(h2, 0.0).astype(cdt)
    recon = jnp.dot(h2, w4_ref[...], preferred_element_type=f32) + b4_ref[...]

    # All outputs are full-width, 128-lane-dense -> unmasked vst.
    recon_ref[...] = recon.astype(recon_ref.dtype)
    mu_ref[...] = mu
    logvar_ref[...] = logvar


# -----------------------------------------------------------------------------
# One-time weight preparation (hoisted out of the per-call path)
# -----------------------------------------------------------------------------
def prepare_params(params, z_dim, compute_dtype=jnp.bfloat16):
    """Split the encoder head into [mu | logvar] blocks, each padded to a
    128-lane boundary, zero-pad every feature dim to a multiple of 128 and cast
    matmul weights to `compute_dtype` for the MXU.  Biases stay f32 (added
    post-accumulation).  Call once; reuse the result on every forward."""
    w1, b1, w2, b2, w3, b3, w4, b4 = params
    input_dim, hidden_dim = w1.shape
    ip = _round_up(input_dim, 128)
    hp = _round_up(hidden_dim, 128)
    zp = _round_up(z_dim, 128)

    def pad2(a, rows, cols, dtype=None):
        a = jnp.pad(a, ((0, rows - a.shape[0]), (0, cols - a.shape[1])))
        return a.astype(dtype) if dtype is not None else a

    # TODO(synk): for very large hidden dims on v7x consider fp8 storage for
    # w1/w4 (bf16 activations) to exploit the fp8 MXU path and halve weight DMA.
    w2_heads = jnp.concatenate(
        [pad2(w2[:, :z_dim], hidden_dim, zp),
         pad2(w2[:, z_dim:], hidden_dim, zp)], axis=1)
    w2_heads = pad2(w2_heads, hp, 2 * zp, compute_dtype)
    b2_heads = jnp.concatenate(
        [pad2(b2[:, :z_dim], 1, zp), pad2(b2[:, z_dim:], 1, zp)], axis=1)

    prepped = (
        pad2(w1, ip, hp, compute_dtype), pad2(b1, 1, hp),
        w2_heads, b2_heads,
        pad2(w3, zp, hp, compute_dtype), pad2(b3, 1, hp),
        pad2(w4, hp, ip, compute_dtype), pad2(b4, 1, ip),
    )
    dims = (input_dim, hidden_dim, z_dim, ip, hp, zp)
    return prepped, dims


# -----------------------------------------------------------------------------
# Capability probe: single-buffered constant blocks (pipeline_mode=Buffered(1))
# -----------------------------------------------------------------------------
_BUFFERED1_OK = None


def _single_buffer_supported():
    """Probe (once, tiny eager compile) whether pl.Buffered(1) works correctly."""
    global _BUFFERED1_OK
    if _BUFFERED1_OK is None:
        try:
            def probe(w_ref, o_ref):
                o_ref[...] = w_ref[...] + 1.0

            out = pl.pallas_call(
                probe,
                out_shape=jax.ShapeDtypeStruct((8, 128), jnp.float32),
                grid=(2,),
                in_specs=[pl.BlockSpec((8, 128), lambda i: (0, 0),
                                       pipeline_mode=pl.Buffered(1))],
                out_specs=pl.BlockSpec((8, 128), lambda i: (0, 0)),
            )(jnp.zeros((8, 128), jnp.float32))
            out = np.asarray(jax.block_until_ready(out))
            _BUFFERED1_OK = bool(np.allclose(out, 1.0))
        except Exception:
            _BUFFERED1_OK = False
    return _BUFFERED1_OK


# -----------------------------------------------------------------------------
# Fused forward
# -----------------------------------------------------------------------------
def vae_forward(x, eps, prepped, dims, *, batch_tile=256,
                recon_dtype=None, compute_dtype=jnp.bfloat16):
    """Fused VAE forward.

    x: (B, input_dim) f32, eps: (B, z_dim) f32 (reparameterization noise).
    `prepped`, `dims` come from prepare_params (call once, reuse).
    Returns (recon, mu, logvar); recon in `recon_dtype` (default: compute
    dtype), mu/logvar in f32, trimmed to the original dims.
    """
    w1, b1, w2h, b2h, w3, b3, w4, b4 = prepped
    input_dim, hidden_dim, z_dim, ip, hp, zp = dims
    if recon_dtype is None:
        recon_dtype = compute_dtype

    B = x.shape[0]
    # Batch tile: multiple of 16 (bf16 packs 16 rows per vreg sublane group).
    # Default 256 fills the MXU M dim on v6e/v7x.  Pick batch_tile so that the
    # grid has >= 4 steps when B allows: v7x shards the "parallel" grid over
    # its 2 TensorCores and each core needs >= 2 steps for DMA/compute overlap.
    tb = _round_up(max(16, min(batch_tile, B)), 16)
    Bp = _round_up(B, tb)
    grid = (Bp // tb,)

    x_p = jnp.pad(x, ((0, Bp - B), (0, ip - input_dim))).astype(compute_dtype)
    eps_p = jnp.pad(eps, ((0, Bp - B), (0, zp - z_dim))).astype(jnp.float32)

    single_buf = _single_buffer_supported()

    def wspec(r, c):  # replicated weights/biases (constant index_map)
        if single_buf:
            return pl.BlockSpec((r, c), lambda i: (0, 0),
                                pipeline_mode=pl.Buffered(1))
        return pl.BlockSpec((r, c), lambda i: (0, 0))

    tile = lambda c: pl.BlockSpec((tb, c), lambda i: (i, 0))  # batch-tiled

    # ---- explicit VMEM budget (portable to v7x's 64 MiB VMEM) ----
    cbytes = np.dtype(compute_dtype).itemsize
    rbytes = np.dtype(recon_dtype).itemsize
    weight_bytes = sum(int(np.prod(a.shape)) * a.dtype.itemsize
                       for a in (w1, b1, w2h, b2h, w3, b3, w4, b4))
    weight_bytes *= 1 if single_buf else 2
    act_bytes = 2 * (tb * ip * cbytes + tb * zp * 4)       # x, eps (double-buffered)
    out_bytes = 2 * (tb * ip * rbytes + 2 * tb * zp * 4)   # recon, mu, logvar
    needed = weight_bytes + act_bytes + out_bytes
    # TODO(synk): if `needed` ever approaches ~48 MiB (huge hidden_dim on v7x),
    # add a hidden-dim grid axis instead of keeping whole weights resident.
    vmem_limit = int(min(max(needed * 5 // 4 + (8 << 20), 32 << 20), 64 << 20))

    # Advisory cost estimate: real (unpadded) dims for flops/transcendentals,
    # padded arrays for actual bytes moved.
    flops = 2 * B * (input_dim * hidden_dim + hidden_dim * 2 * z_dim
                     + z_dim * hidden_dim + hidden_dim * input_dim)
    bytes_accessed = (sum(int(np.prod(a.shape)) * a.dtype.itemsize for a in
                          (x_p, eps_p, w1, b1, w2h, b2h, w3, b3, w4, b4))
                      + Bp * ip * rbytes + 2 * Bp * zp * 4)

    recon_p, mu_p, logvar_p = pl.pallas_call(
        _vae_kernel,
        out_shape=(
            jax.ShapeDtypeStruct((Bp, ip), recon_dtype),   # reconstruction
            jax.ShapeDtypeStruct((Bp, zp), jnp.float32),   # mu
            jax.ShapeDtypeStruct((Bp, zp), jnp.float32),   # logvar
        ),
        grid_spec=pltpu.PrefetchScalarGridSpec(
            num_scalar_prefetch=0,
            grid=grid,
            in_specs=[
                tile(ip),                              # x
                wspec(ip, hp), wspec(1, hp),           # w1, b1
                wspec(hp, 2 * zp), wspec(1, 2 * zp),   # w2 heads, b2 heads
                tile(zp),                              # eps
                wspec(zp, hp), wspec(1, hp),           # w3, b3
                wspec(hp, ip), wspec(1, ip),           # w4, b4
            ],
            out_specs=[tile(ip), tile(zp), tile(zp)],
        ),
        compiler_params=pltpu.CompilerParams(
            dimension_semantics=("parallel",),
            vmem_limit_bytes=vmem_limit),
        cost_estimate=pl.CostEstimate(
            flops=flops, transcendentals=B * z_dim,
            bytes_accessed=bytes_accessed),
    )(x_p, w1, b1, w2h, b2h, eps_p, w3, b3, w4, b4)

    # Trim batch + feature padding (torch.chunk equivalent happened at prep).
    return (recon_p[:B, :input_dim], mu_p[:B, :z_dim], logvar_p[:B, :z_dim])


# -----------------------------------------------------------------------------
# Init + references
# -----------------------------------------------------------------------------
def init_params(key, input_dim, hidden_dim, z_dim):
    """nn.Linear-style U(-1/sqrt(fan_in), +1/sqrt(fan_in)) init.
    Weights stored (in_features, out_features) = PyTorch weight transposed."""
    keys = jax.random.split(key, 8)

    def linear(kw, kb, fan_in, fan_out):
        bound = 1.0 / np.sqrt(fan_in)
        w = jax.random.uniform(kw, (fan_in, fan_out), jnp.float32, -bound, bound)
        b = jax.random.uniform(kb, (1, fan_out), jnp.float32, -bound, bound)
        return w, b

    w1, b1 = linear(keys[0], keys[1], input_dim, hidden_dim)
    w2, b2 = linear(keys[2], keys[3], hidden_dim, 2 * z_dim)
    w3, b3 = linear(keys[4], keys[5], z_dim, hidden_dim)
    w4, b4 = linear(keys[6], keys[7], hidden_dim, input_dim)
    return (w1, b1, w2, b2, w3, b3, w4, b4)


def _reference_f32(x, params, eps):
    """Pure-f32 JAX reference of the PyTorch forward (semantic sanity check)."""
    w1, b1, w2, b2, w3, b3, w4, b4 = params
    h1 = jnp.maximum(x @ w1 + b1, 0.0)
    enc = h1 @ w2 + b2
    z_dim = w3.shape[0]
    mu, logvar = enc[:, :z_dim], enc[:, z_dim:]
    z = mu + eps * jnp.exp(0.5 * logvar)
    h2 = jnp.maximum(z @ w3 + b3, 0.0)
    recon = h2 @ w4 + b4
    return recon, mu, logvar


def _reference_matched(x, eps, prepped, dims, recon_dtype, compute_dtype):
    """Same math with the same padding / bf16 rounding / fused head as kernel."""
    w1, b1, w2h, b2h, w3, b3, w4, b4 = prepped
    input_dim, hidden_dim, z_dim, ip, hp, zp = dims
    f32 = jnp.float32
    x_p = jnp.pad(x, ((0, 0), (0, ip - input_dim))).astype(compute_dtype)
    eps_p = jnp.pad(eps, ((0, 0), (0, zp - z_dim)))
    h1 = jnp.maximum(jnp.dot(x_p, w1, preferred_element_type=f32) + b1, 0.0)
    h1 = h1.astype(compute_dtype)
    enc = jnp.dot(h1, w2h, preferred_element_type=f32) + b2h
    mu, logvar = enc[:, :zp], enc[:, zp:]
    z = (mu + eps_p * jnp.exp(0.5 * logvar)).astype(compute_dtype)
    h2 = jnp.maximum(jnp.dot(z, w3, preferred_element_type=f32) + b3, 0.0)
    h2 = h2.astype(compute_dtype)
    recon = (jnp.dot(h2, w4, preferred_element_type=f32) + b4).astype(recon_dtype)
    return recon[:, :input_dim], mu[:, :z_dim], logvar[:, :z_dim]


def _f32np(a):
    return np.asarray(jnp.asarray(a, jnp.float32))


if __name__ == "__main__":
    input_dim, hidden_dim, z_dim = 32, 32, 2
    batch = 1024  # 4 grid steps of 256 -> >=2 pipelined steps per v7x TensorCore

    key = jax.random.PRNGKey(0)
    k_params, k_x, k_eps = jax.random.split(key, 3)

    params = init_params(k_params, input_dim, hidden_dim, z_dim)
    x = jax.random.normal(k_x, (batch, input_dim), jnp.float32)
    eps = jax.random.normal(k_eps, (batch, z_dim), jnp.float32)  # randn_like(std)

    # One-time weight prep (hoisted out of the hot path) + capability probe,
    # then a jitted forward that reuses the prepared weights every call.
    prepped, dims = prepare_params(params, z_dim)
    _single_buffer_supported()
    fwd = jax.jit(functools.partial(vae_forward, dims=dims))

    recon, mu, logvar = jax.block_until_ready(fwd(x, eps, prepped))

    # Exact-dtype reference (same padded bf16 weights / fused head as kernel).
    m_recon, m_mu, m_logvar = _reference_matched(
        x, eps, prepped, dims, jnp.bfloat16, jnp.bfloat16)
    np.testing.assert_allclose(_f32np(recon), _f32np(m_recon), rtol=1e-4, atol=1e-4)
    np.testing.assert_allclose(_f32np(mu), _f32np(m_mu), rtol=1e-4, atol=1e-4)
    np.testing.assert_allclose(_f32np(logvar), _f32np(m_logvar), rtol=1e-4, atol=1e-4)

    # Loose semantic sanity check vs. the pure-f32 PyTorch-equivalent math.
    r_recon, r_mu, r_logvar = _reference_f32(x, params, eps)
    np.testing.assert_allclose(_f32np(recon), _f32np(r_recon), rtol=1e-1, atol=1e-1)
    np.testing.assert_allclose(_f32np(mu), _f32np(r_mu), rtol=1e-1, atol=1e-1)
    np.testing.assert_allclose(_f32np(logvar), _f32np(r_logvar), rtol=1e-1, atol=1e-1)

    print("KERNEL_OK")
</pallas_src>

<mosaic_0001>
module attributes {stable_mosaic.version = 11 : i64} {
  func.func @probe(%arg0: i32, %arg1: memref<8x128xf32, #tpu.memory_space<vmem>>, %arg2: memref<8x128xf32, #tpu.memory_space<vmem>>) attributes {dimension_semantics = [#tpu.dimension_semantics<arbitrary>], iteration_bounds = array<i64: 2>, scalar_prefetch = 0 : i64, scratch_operands = 0 : i64, tpu.core_type = #tpu.core_type<tc>, window_params = [{pipeline_mode = #tpu.pipeline_mode<synchronous>, transform_indices = @transform_0, window_bounds = array<i64: 8, 128>}, {pipeline_mode = #tpu.pipeline_mode<synchronous>, transform_indices = @transform_1, window_bounds = array<i64: 8, 128>}]} {
    %c0 = arith.constant 0 : index
    %c0_0 = arith.constant 0 : index
    %0 = vector.load %arg1[%c0, %c0_0] : memref<8x128xf32, #tpu.memory_space<vmem>>, vector<8x128xf32>
    %cst = arith.constant 1.000000e+00 : f32
    %1 = vector.broadcast %cst : f32 to vector<8x128xf32>
    %2 = arith.addf %0, %1 : vector<8x128xf32>
    %c0_1 = arith.constant 0 : index
    %c0_2 = arith.constant 0 : index
    %3 = vector.load %arg2[%c0_1, %c0_2] : memref<8x128xf32, #tpu.memory_space<vmem>>, vector<8x128xf32>
    tpu.vector_store %arg2[%c0_1, %c0_2], %2 {strides = array<i32>} : memref<8x128xf32, #tpu.memory_space<vmem>>, vector<8x128xf32>,
    return
  }
  func.func @transform_0(%arg0: i32) -> (i32, i32) {
    %c0_i32 = arith.constant 0 : i32
    %c0_i32_0 = arith.constant 0 : i32
    %c0_i32_1 = arith.constant 0 : i32
    return %c0_i32, %c0_i32_0 : i32, i32
  }
  func.func @transform_1(%arg0: i32) -> (i32, i32) {
    %c0_i32 = arith.constant 0 : i32
    %c0_i32_0 = arith.constant 0 : i32
    %c0_i32_1 = arith.constant 0 : i32
    return %c0_i32, %c0_i32_0 : i32, i32
  }
}

module attributes {stable_mosaic.version = 11 : i64} {
  func.func @_vae_kernel(%arg0: i32, %arg1: memref<256x128xbf16, #tpu.memory_space<vmem>>, %arg2: memref<128x128xbf16, #tpu.memory_space<vmem>>, %arg3: memref<1x128xf32, #tpu.memory_space<vmem>>, %arg4: memref<128x256xbf16, #tpu.memory_space<vmem>>, %arg5: memref<1x256xf32, #tpu.memory_space<vmem>>, %arg6: memref<256x128xf32, #tpu.memory_space<vmem>>, %arg7: memref<128x128xbf16, #tpu.memory_space<vmem>>, %arg8: memref<1x128xf32, #tpu.memory_space<vmem>>, %arg9: memref<128x128xbf16, #tpu.memory_space<vmem>>, %arg10: memref<1x128xf32, #tpu.memory_space<vmem>>, %arg11: memref<256x128xbf16, #tpu.memory_space<vmem>>, %arg12: memref<256x128xf32, #tpu.memory_space<vmem>>, %arg13: memref<256x128xf32, #tpu.memory_space<vmem>>) attributes {dimension_semantics = [#tpu.dimension_semantics<parallel>], iteration_bounds = array<i64: 4>, scalar_prefetch = 0 : i64, scratch_operands = 0 : i64, tpu.core_type = #tpu.core_type<tc>, window_params = [{transform_indices = @transform_0, window_bounds = array<i64: 256, 128>}, {pipeline_mode = #tpu.pipeline_mode<synchronous>, transform_indices = @transform_1, window_bounds = array<i64: 128, 128>}, {pipeline_mode = #tpu.pipeline_mode<synchronous>, transform_indices = @transform_2, window_bounds = array<i64: 1, 128>}, {pipeline_mode = #tpu.pipeline_mode<synchronous>, transform_indices = @transform_3, window_bounds = array<i64: 128, 256>}, {pipeline_mode = #tpu.pipeline_mode<synchronous>, transform_indices = @transform_4, window_bounds = array<i64: 1, 256>}, {transform_indices = @transform_5, window_bounds = array<i64: 256, 128>}, {pipeline_mode = #tpu.pipeline_mode<synchronous>, transform_indices = @transform_6, window_bounds = array<i64: 128, 128>}, {pipeline_mode = #tpu.pipeline_mode<synchronous>, transform_indices = @transform_7, window_bounds = array<i64: 1, 128>}, {pipeline_mode = #tpu.pipeline_mode<synchronous>, transform_indices = @transform_8, window_bounds = array<i64: 128, 128>}, {pipeline_mode = #tpu.pipeline_mode<synchronous>, transform_indices = @transform_9, window_bounds = array<i64: 1, 128>}, {transform_indices = @transform_10, window_bounds = array<i64: 256, 128>}, {transform_indices = @transform_11, window_bounds = array<i64: 256, 128>}, {transform_indices = @transform_12, window_bounds = array<i64: 256, 128>}]} {
    %c0 = arith.constant 0 : index
    %c0_0 = arith.constant 0 : index
    %0 = vector.load %arg1[%c0, %c0_0] : memref<256x128xbf16, #tpu.memory_space<vmem>>, vector<256x128xbf16>
    %c0_1 = arith.constant 0 : index
    %c0_2 = arith.constant 0 : index
    %1 = vector.load %arg2[%c0_1, %c0_2] : memref<128x128xbf16, #tpu.memory_space<vmem>>, vector<128x128xbf16>
    %cst = arith.constant dense<0.000000e+00> : vector<256x128xf32>
    %2 = tpu.matmul %0, %1, %cst {dimension_numbers = #tpu.dot_dimension_numbers<[1], [0], [0], [1], [0, 0, 1, 1], [], []>} : vector<256x128xbf16>, vector<128x128xbf16>, vector<256x128xf32> -> vector<256x128xf32>
    %c0_3 = arith.constant 0 : index
    %c0_4 = arith.constant 0 : index
    %3 = vector.load %arg3[%c0_3, %c0_4] : memref<1x128xf32, #tpu.memory_space<vmem>>, vector<1x128xf32>
    %4 = vector.broadcast %3 : vector<1x128xf32> to vector<256x128xf32>
    %5 = arith.addf %2, %4 : vector<256x128xf32>
    %cst_5 = arith.constant 0.000000e+00 : f32
    %6 = vector.broadcast %cst_5 : f32 to vector<256x128xf32>
    %7 = arith.maximumf %5, %6 : vector<256x128xf32>
    %8 = arith.truncf %7 : vector<256x128xf32> to vector<256x128xbf16>
    %c0_6 = arith.constant 0 : index
    %c0_7 = arith.constant 0 : index
    %9 = vector.load %arg4[%c0_6, %c0_7] : memref<128x256xbf16, #tpu.memory_space<vmem>>, vector<128x256xbf16>
    %cst_8 = arith.constant dense<0.000000e+00> : vector<256x256xf32>
    %10 = tpu.matmul %8, %9, %cst_8 {dimension_numbers = #tpu.dot_dimension_numbers<[1], [0], [0], [1], [0, 0, 1, 1], [], []>} : vector<256x128xbf16>, vector<128x256xbf16>, vector<256x256xf32> -> vector<256x256xf32>
    %c0_9 = arith.constant 0 : index
    %c0_10 = arith.constant 0 : index
    %11 = vector.load %arg5[%c0_9, %c0_10] : memref<1x256xf32, #tpu.memory_space<vmem>>, vector<1x256xf32>
    %12 = vector.broadcast %11 : vector<1x256xf32> to vector<256x256xf32>
    %13 = arith.addf %10, %12 : vector<256x256xf32>
    %14 = vector.extract_strided_slice %13 {offsets = [0, 0], sizes = [256, 128], strides = [1, 1]} : vector<256x256xf32> to vector<256x128xf32>
    %15 = vector.extract_strided_slice %13 {offsets = [0, 128], sizes = [256, 128], strides = [1, 1]} : vector<256x256xf32> to vector<256x128xf32>
    %cst_11 = arith.constant 5.000000e-01 : f32
    %16 = vector.broadcast %cst_11 : f32 to vector<256x128xf32>
    %17 = arith.mulf %16, %15 : vector<256x128xf32>
    %18 = math.exp %17 : vector<256x128xf32>
    %c0_12 = arith.constant 0 : index
    %c0_13 = arith.constant 0 : index
    %19 = vector.load %arg6[%c0_12, %c0_13] : memref<256x128xf32, #tpu.memory_space<vmem>>, vector<256x128xf32>
    %20 = arith.mulf %19, %18 : vector<256x128xf32>
    %21 = arith.addf %14, %20 : vector<256x128xf32>
    %22 = arith.truncf %21 : vector<256x128xf32> to vector<256x128xbf16>
    %c0_14 = arith.constant 0 : index
    %c0_15 = arith.constant 0 : index
    %23 = vector.load %arg7[%c0_14, %c0_15] : memref<128x128xbf16, #tpu.memory_space<vmem>>, vector<128x128xbf16>
    %cst_16 = arith.constant dense<0.000000e+00> : vector<256x128xf32>
    %24 = tpu.matmul %22, %23, %cst_16 {dimension_numbers = #tpu.dot_dimension_numbers<[1], [0], [0], [1], [0, 0, 1, 1], [], []>} : vector<256x128xbf16>, vector<128x128xbf16>, vector<256x128xf32> -> vector<256x128xf32>
    %c0_17 = arith.constant 0 : index
    %c0_18 = arith.constant 0 : index
    %25 = vector.load %arg8[%c0_17, %c0_18] : memref<1x128xf32, #tpu.memory_space<vmem>>, vector<1x128xf32>
    %26 = vector.broadcast %25 : vector<1x128xf32> to vector<256x128xf32>
    %27 = arith.addf %24, %26 : vector<256x128xf32>
    %cst_19 = arith.constant 0.000000e+00 : f32
    %28 = vector.broadcast %cst_19 : f32 to vector<256x128xf32>
    %29 = arith.maximumf %27, %28 : vector<256x128xf32>
    %30 = arith.truncf %29 : vector<256x128xf32> to vector<256x128xbf16>
    %c0_20 = arith.constant 0 : index
    %c0_21 = arith.constant 0 : index
    %31 = vector.load %arg9[%c0_20, %c0_21] : memref<128x128xbf16, #tpu.memory_space<vmem>>, vector<128x128xbf16>
    %cst_22 = arith.constant dense<0.000000e+00> : vector<256x128xf32>
    %32 = tpu.matmul %30, %31, %cst_22 {dimension_numbers = #tpu.dot_dimension_numbers<[1], [0], [0], [1], [0, 0, 1, 1], [], []>} : vector<256x128xbf16>, vector<128x128xbf16>, vector<256x128xf32> -> vector<256x128xf32>
    %c0_23 = arith.constant 0 : index
    %c0_24 = arith.constant 0 : index
    %33 = vector.load %arg10[%c0_23, %c0_24] : memref<1x128xf32, #tpu.memory_space<vmem>>, vector<1x128xf32>
    %34 = vector.broadcast %33 : vector<1x128xf32> to vector<256x128xf32>
    %35 = arith.addf %32, %34 : vector<256x128xf32>
    %36 = arith.truncf %35 : vector<256x128xf32> to vector<256x128xbf16>
    %c0_25 = arith.constant 0 : index
    %c0_26 = arith.constant 0 : index
    %37 = vector.load %arg11[%c0_25, %c0_26] : memref<256x128xbf16, #tpu.memory_space<vmem>>, vector<256x128xbf16>
    tpu.vector_store %arg11[%c0_25, %c0_26], %36 {strides = array<i32>} : memref<256x128xbf16, #tpu.memory_space<vmem>>, vector<256x128xbf16>,
    %c0_27 = arith.constant 0 : index
    %c0_28 = arith.constant 0 : index
    %38 = vector.load %arg12[%c0_27, %c0_28] : memref<256x128xf32, #tpu.memory_space<vmem>>, vector<256x128xf32>
    tpu.vector_store %arg12[%c0_27, %c0_28], %14 {strides = array<i32>} : memref<256x128xf32, #tpu.memory_space<vmem>>, vector<256x128xf32>,
    %c0_29 = arith.constant 0 : index
    %c0_30 = arith.constant 0 : index
    %39 = vector.load %arg13[%c0_29, %c0_30] : memref<256x128xf32, #tpu.memory_space<vmem>>, vector<256x128xf32>
    tpu.vector_store %arg13[%c0_29, %c0_30], %15 {strides = array<i32>} : memref<256x128xf32, #tpu.memory_space<vmem>>, vector<256x128xf32>,
    return
  }
  func.func @transform_0(%arg0: i32) -> (i32, i32) {
    %c0_i32 = arith.constant 0 : i32
    %c0_i32_0 = arith.constant 0 : i32
    return %arg0, %c0_i32 : i32, i32
  }
  func.func @transform_1(%arg0: i32) -> (i32, i32) {
    %c0_i32 = arith.constant 0 : i32
    %c0_i32_0 = arith.constant 0 : i32
    %c0_i32_1 = arith.constant 0 : i32
    return %c0_i32, %c0_i32_0 : i32, i32
  }
  func.func @transform_2(%arg0: i32) -> (i32, i32) {
    %c0_i32 = arith.constant 0 : i32
    %c0_i32_0 = arith.constant 0 : i32
    %c0_i32_1 = arith.constant 0 : i32
    return %c0_i32, %c0_i32_0 : i32, i32
  }
  func.func @transform_3(%arg0: i32) -> (i32, i32) {
    %c0_i32 = arith.constant 0 : i32
    %c0_i32_0 = arith.constant 0 : i32
    %c0_i32_1 = arith.constant 0 : i32
    return %c0_i32, %c0_i32_0 : i32, i32
  }
  func.func @transform_4(%arg0: i32) -> (i32, i32) {
    %c0_i32 = arith.constant 0 : i32
    %c0_i32_0 = arith.constant 0 : i32
    %c0_i32_1 = arith.constant 0 : i32
    return %c0_i32, %c0_i32_0 : i32, i32
  }
  func.func @transform_5(%arg0: i32) -> (i32, i32) {
    %c0_i32 = arith.constant 0 : i32
    %c0_i32_0 = arith.constant 0 : i32
    return %arg0, %c0_i32 : i32, i32
  }
  func.func @transform_6(%arg0: i32) -> (i32, i32) {
    %c0_i32 = arith.constant 0 : i32
    %c0_i32_0 = arith.constant 0 : i32
    %c0_i32_1 = arith.constant 0 : i32
    return %c0_i32, %c0_i32_0 : i32, i32
  }
  func.func @transform_7(%arg0: i32) -> (i32, i32) {
    %c0_i32 = arith.constant 0 : i32
    %c0_i32_0 = arith.constant 0 : i32
    %c0_i32_1 = arith.constant 0 : i32
    return %c0_i32, %c0_i32_0 : i32, i32
  }
  func.func @transform_8(%arg0: i32) -> (i32, i32) {
    %c0_i32 = arith.constant 0 : i32
    %c0_i32_0 = arith.constant 0 : i32
    %c0_i32_1 = arith.constant 0 : i32
    return %c0_i32, %c0_i32_0 : i32, i32
  }
  func.func @transform_9(%arg0: i32) -> (i32, i32) {
    %c0_i32 = arith.constant 0 : i32
    %c0_i32_0 = arith.constant 0 : i32
    %c0_i32_1 = arith.constant 0 : i32
    return %c0_i32, %c0_i32_0 : i32, i32
  }
  func.func @transform_10(%arg0: i32) -> (i32, i32) {
    %c0_i32 = arith.constant 0 : i32
    %c0_i32_0 = arith.constant 0 : i32
    return %arg0, %c0_i32 : i32, i32
  }
  func.func @transform_11(%arg0: i32) -> (i32, i32) {
    %c0_i32 = arith.constant 0 : i32
    %c0_i32_0 = arith.constant 0 : i32
    return %arg0, %c0_i32 : i32, i32
  }
  func.func @transform_12(%arg0: i32) -> (i32, i32) {
    %c0_i32 = arith.constant 0 : i32
    %c0_i32_0 = arith.constant 0 : i32
    return %arg0, %c0_i32 : i32, i32
  }
}

</mosaic_0001>

<llo_original>
// kernel: tpu_custom_call.1
$region0: #{tpu_custom_call.1}
  #allocation0 [shape = 'u32[]', space=smem, size = 0x4, offset = 0x4, fixed_abs, tag = 'smem constant byte address 0x4 - core index']
  #allocation1 [shape = 'u32[144,128]{1,0:T(1,128)}', space=vmem, size = 0x12000, scoped, tag = 'internal scratch']
  %s0 = inlined_call_operand.hbm [shape: f32[8,128], index: 0, kind: input, shape index: {}]
  %s1 = inlined_call_operand.hbm [shape: f32[8,128], index: 1, kind: output, shape index: {}]
  %s2 = sld [smem:[#allocation0]]
  $region41: #{tpu_custom_call.1} parent=0
    _
  %s4 = ssub.s32 1, %s2
  %s5 = scalar_select 0, %s4, %s2
  $region1: #{tpu_custom_call.1} parent=0
    #allocation2 [shape = 'u8[4096]{0}', space=vmem, size = 0x1000, scoped, tag = 'input window, operand 0, single buffered']
    #allocation3 [shape = 's32[2]{0}', space=sflag, size = 0x8, scoped, tag = 'scoped memory for tpu_custom_call.1']
    #allocation4 [shape = 's32[2]{0}', space=sflag, size = 0x8, scoped, tag = 'scoped memory for tpu_custom_call.1']
    #allocation5 [shape = 'u8[4096]{0}', space=vmem, size = 0x1000, scoped, tag = 'output window, operand 0, single buffered']
    %6 = vsyncpa [#allocation3], 0
    %7 = vsyncpa [#allocation4], 0
    loop: start=0, step=1, limit=4
    $region2: #{tpu_custom_call.1} parent=1 // loop_pre_header
      _
    $region3: #{tpu_custom_call.1} parent=1 // loop_header
      %s9 = sphi 0, %s13
      %p10 = scmp.ge.s32.totalorder %s9, 4
      %s17 = sphi 0, %s17
      %s19 = sphi 0, %s17
      %s20 = sphi 0, %s19
      %s34 = sphi 0, %s20
      %s38 = sphi 0, %s38
      %s40 = sphi 0, %s38
      %s41 = sphi 0, %s40
      %s55 = sphi 0, %s41
    $region4: #{tpu_custom_call.1} parent=1 // loop_header_branch
      %12 = sbr.rel (%p10) target = $region8
    $region5: #{tpu_custom_call.1} parent=1 // loop_body
      %s14 = ssub.s32 %s9, 1
      %s15 = ssub.s32 %s9, 2
      %s16 = sadd.s32 %s9, 1
      %s18 = sadd.s32 %s17, 1
      %p21 = scmp.eq.s32.totalorder %s9, 1
      %p22 = scmp.ne.s32.totalorder %s17, %s19
      %p23 = scmp.eq.s32.totalorder %s9, 0
      %p24 = por %p22, %p23
      %p25 = scmp.ne.s32.totalorder %s17, %s19
      %p26 = scmp.eq.s32.totalorder %s14, 1
      %p27 = por %p25, %p26
      %p28 = scmp.ne.s32.totalorder %s19, %s20
      %p29 = scmp.eq.s32.totalorder %s14, 0
      %p30 = por %p28, %p29
      %p31 = scmp.ne.s32.totalorder %s19, %s20
      %p32 = scmp.eq.s32.totalorder %s15, 1
      %p33 = por %p31, %p32
      %p35 = scmp.ne.s32.totalorder %s20, %s34
      %p36 = scmp.eq.s32.totalorder %s15, 0
      %p37 = por %p35, %p36
      %s39 = sadd.s32 %s38, 1
      %p42 = scmp.eq.s32.totalorder %s9, 1
      %p43 = scmp.ne.s32.totalorder %s38, %s40
      %p44 = scmp.eq.s32.totalorder %s9, 0
      %p45 = por %p43, %p44
      %p46 = scmp.ne.s32.totalorder %s38, %s40
      %p47 = scmp.eq.s32.totalorder %s14, 1
      %p48 = por %p46, %p47
      %p49 = scmp.ne.s32.totalorder %s40, %s41
      %p50 = scmp.eq.s32.totalorder %s14, 0
      %p51 = por %p49, %p50
      %p52 = scmp.ne.s32.totalorder %s40, %s41
      %p53 = scmp.eq.s32.totalorder %s15, 1
      %p54 = por %p52, %p53
      %p56 = scmp.ne.s32.totalorder %s41, %s55
      %p57 = scmp.eq.s32.totalorder %s15, 0
      %p58 = por %p56, %p57
      %p59 = scmp.le.s32.totalorder 1, %s9
      %p60 = scmp.lt.s32.totalorder %s9, 3
      %p61 = pnand %p59, %p60
      %p62 = pneg %p61
      // Predicated region
      $region9: #{tpu_custom_call.1} parent=5 // pred_check
        _
      $region10: #{tpu_custom_call.1} parent=5 // pred_check_branch
        %64 = sbr.rel (%p61) target = $region12
      $region11: #{tpu_custom_call.1} parent=5 // pred_region
        %s65 = ssub.s32 %s9, 1
        // Predicated region
        $region13: #{tpu_custom_call.1} parent=11 // pred_check
          %p66 = pneg %p30
        $region14: #{tpu_custom_call.1} parent=11 // pred_check_branch
          %68 = sbr.rel (%p66) target = $region16
        $region15: #{tpu_custom_call.1} parent=11 // pred_region
          %s70 = ssub.s32 128, 128
          %71 = vsyncadd [#allocation3], %s70
          %s73 = sshll.u32 [#allocation2], 4
          %s74 = int_to_ptr.vmem [resolvable:$true] %s73
          %76 = dma.hbm_to_vmem [thread:$0]  %s0, 128, %s74, [#allocation3]
        $region16: #{tpu_custom_call.1} parent=11 // pred_fallthru
          _
      $region12: #{tpu_custom_call.1} parent=5 // pred_fallthru
        _
      %p77 = scmp.lt.s32.totalorder %s9, 2
      // Predicated region
      $region17: #{tpu_custom_call.1} parent=5 // pred_check
        %p78 = pneg %p77
      $region18: #{tpu_custom_call.1} parent=5 // pred_check_branch
        %80 = sbr.rel (%p78) target = $region20
      $region19: #{tpu_custom_call.1} parent=5 // pred_region
        _
      $region20: #{tpu_custom_call.1} parent=5 // pred_fallthru
        _
      %p81 = scmp.le.s32.totalorder 1, %s9
      %p82 = scmp.lt.s32.totalorder %s9, 3
      %p83 = pnand %p81, %p82
      %p84 = pneg %p83
      // Predicated region
      $region21: #{tpu_custom_call.1} parent=5 // pred_check
        _
      $region22: #{tpu_custom_call.1} parent=5 // pred_check_branch
        %86 = sbr.rel (%p83) target = $region24
      $region23: #{tpu_custom_call.1} parent=5 // pred_region
        %s87 = ssub.s32 %s9, 1
        // Predicated region
        $region25: #{tpu_custom_call.1} parent=23 // pred_check
          %p88 = pneg %p30
        $region26: #{tpu_custom_call.1} parent=23 // pred_check_branch
          %90 = sbr.rel (%p88) target = $region28
        $region27: #{tpu_custom_call.1} parent=23 // pred_region
          %91 = dma.done [#allocation3], 128
        $region28: #{tpu_custom_call.1} parent=23 // pred_fallthru
          _
        %p92 = pneg %p30
        %p93 = pneg %p27
        %p94 = pneg %p51
        %p95 = pneg %p48
        %v96 = vld [vmem:[#allocation2] sm:$0xff]
        %v97 = vadd.f32 %v96, 1.0
        %98 = vst [vmem:[#allocation5] sm:$0xff] %v97
        // Predicated region
        $region29: #{tpu_custom_call.1} parent=23 // pred_check
          %p99 = pneg %p48
        $region30: #{tpu_custom_call.1} parent=23 // pred_check_branch
          %101 = sbr.rel (%p99) target = $region32
        $region31: #{tpu_custom_call.1} parent=23 // pred_region
          %s103 = ssub.s32 128, 128
          %104 = vsyncadd [#allocation4], %s103
          %s106 = sshll.u32 [#allocation5], 4
          %s107 = int_to_ptr.vmem [resolvable:$true] %s106
          %109 = dma.vmem_to_hbm [thread:$0]  %s107, 128, %s1, [#allocation4]
        $region32: #{tpu_custom_call.1} parent=23 // pred_fallthru
          _
        // Predicated region
        $region33: #{tpu_custom_call.1} parent=23 // pred_check
          %p110 = pneg %p48
        $region34: #{tpu_custom_call.1} parent=23 // pred_check_branch
          %112 = sbr.rel (%p110) target = $region36
        $region35: #{tpu_custom_call.1} parent=23 // pred_region
          %113 = dma.done [#allocation4], 128
        $region36: #{tpu_custom_call.1} parent=23 // pred_fallthru
          _
      $region24: #{tpu_custom_call.1} parent=5 // pred_fallthru
        _
      %p114 = scmp.le.s32.totalorder 2, %s9
      // Predicated region
      $region37: #{tpu_custom_call.1} parent=5 // pred_check
        %p115 = pneg %p114
      $region38: #{tpu_custom_call.1} parent=5 // pred_check_branch
        %117 = sbr.rel (%p115) target = $region40
      $region39: #{tpu_custom_call.1} parent=5 // pred_region
        %s118 = ssub.s32 %s9, 2
      $region40: #{tpu_custom_call.1} parent=5 // pred_fallthru
        _
    $region6: #{tpu_custom_call.1} parent=1 // loop_footer
      %s13 = sadd.s32 1, %s9
    $region7: #{tpu_custom_call.1} parent=1 // loop_footer_branch
      %8 = sbr.rel target = $region3
    $region8: #{tpu_custom_call.1} parent=1 // loop_exit
      _
    %119 = vsyncpa [#allocation3], 1
    %s120 = scalar_lea.sflag [#allocation3], 1
    %121 = vsyncpa %s120, 1
    %122 = vsyncpa [#allocation4], 1
    %s123 = scalar_lea.sflag [#allocation4], 1
    %124 = vsyncpa %s123, 1

// kernel: vae_forward.1
$region0: #{vae_forward.1}
  #allocation0 [shape = 'u32[]', space=smem, size = 0x4, offset = 0x4, fixed_abs, tag = 'smem constant byte address 0x4 - core index']
  #allocation1 [shape = 'u32[144,128]{1,0:T(1,128)}', space=vmem, size = 0x12000, scoped, tag = 'internal scratch']
  %s0 = inlined_call_operand.vmem [shape: bf16[1024,128], index: 0, kind: input, shape index: {}]
  %s1 = inlined_call_operand.vmem [shape: bf16[128,128], index: 1, kind: input, shape index: {}]
  %s2 = inlined_call_operand.vmem [shape: f32[1,128], index: 2, kind: input, shape index: {}]
  %s3 = inlined_call_operand.vmem [shape: bf16[128,256], index: 3, kind: input, shape index: {}]
  %s4 = inlined_call_operand.vmem [shape: f32[1,256], index: 4, kind: input, shape index: {}]
  %s5 = inlined_call_operand.vmem [shape: f32[1024,128], index: 5, kind: input, shape index: {}]
  %s6 = inlined_call_operand.vmem [shape: bf16[128,128], index: 6, kind: input, shape index: {}]
  %s7 = inlined_call_operand.vmem [shape: f32[1,128], index: 7, kind: input, shape index: {}]
  %s8 = inlined_call_operand.vmem [shape: bf16[128,128], index: 8, kind: input, shape index: {}]
  %s9 = inlined_call_operand.vmem [shape: f32[1,128], index: 9, kind: input, shape index: {}]
  %s10 = inlined_call_operand.vmem [shape: bf16[1024,128], index: 10, kind: output, shape index: {0}]
  %s11 = inlined_call_operand.vmem [shape: f32[1024,128], index: 11, kind: output, shape index: {1}]
  %s12 = inlined_call_operand.vmem [shape: f32[1024,128], index: 12, kind: output, shape index: {2}]
  %13 = xla_tuple %s10, %s11, %s12
  %s14 = sld [smem:[#allocation0]]
  $region89: #{vae_forward.1} parent=0
    _
  %s16 = ssub.s32 1, %s14
  %s17 = scalar_select 0, %s16, %s14
  loop: start=0, step=1, limit=6
  $region2: #{vae_forward.1} parent=0 // loop_pre_header
    _
  $region3: #{vae_forward.1} parent=0 // loop_header
    %s19 = sphi 0, %s23
    %p20 = scmp.ge.s32.totalorder %s19, 6
    %s29 = sphi 0, %s31
    %s32 = sphi 0, %s29
    %s33 = sphi 0, %s32
    %s49 = sphi 0, %s33
    %s53 = sphi 0, %s53
    %s55 = sphi 0, %s53
    %s56 = sphi 0, %s55
    %s70 = sphi 0, %s56
    %s74 = sphi 0, %s74
    %s76 = sphi 0, %s74
    %s77 = sphi 0, %s76
    %s91 = sphi 0, %s77
    %s95 = sphi 0, %s95
    %s97 = sphi 0, %s95
    %s98 = sphi 0, %s97
    %s112 = sphi 0, %s98
    %s116 = sphi 0, %s116
    %s118 = sphi 0, %s116
    %s119 = sphi 0, %s118
    %s133 = sphi 0, %s119
    %s139 = sphi 0, %s141
    %s142 = sphi 0, %s139
    %s143 = sphi 0, %s142
    %s159 = sphi 0, %s143
    %s163 = sphi 0, %s163
    %s165 = sphi 0, %s163
    %s166 = sphi 0, %s165
    %s180 = sphi 0, %s166
    %s184 = sphi 0, %s184
    %s186 = sphi 0, %s184
    %s187 = sphi 0, %s186
    %s201 = sphi 0, %s187
    %s205 = sphi 0, %s205
    %s207 = sphi 0, %s205
    %s208 = sphi 0, %s207
    %s222 = sphi 0, %s208
    %s226 = sphi 0, %s226
    %s228 = sphi 0, %s226
    %s229 = sphi 0, %s228
    %s243 = sphi 0, %s229
    %s249 = sphi 0, %s251
    %s252 = sphi 0, %s249
    %s253 = sphi 0, %s252
    %s269 = sphi 0, %s253
    %s275 = sphi 0, %s277
    %s278 = sphi 0, %s275
    %s279 = sphi 0, %s278
    %s295 = sphi 0, %s279
    %s301 = sphi 0, %s303
    %s304 = sphi 0, %s301
    %s305 = sphi 0, %s304
    %s321 = sphi 0, %s305
  $region4: #{vae_forward.1} parent=0 // loop_header_branch
    %22 = sbr.rel (%p20) target = $region8
  $region5: #{vae_forward.1} parent=0 // loop_body
    %s24 = ssub.s32 %s19, 1
    %s25 = ssub.s32 %s19, 2
    %s26 = sadd.s32 %s19, 1
    %s27 = ssub.s32 %s19, %s26
    %p28 = scmp.eq.s32.totalorder %s27, 0
    %s30 = sadd.s32 %s29, 1
    %s31 = scalar_select %p28, %s29, %s30
    %p34 = pneg %p28
    %p35 = scmp.eq.s32.totalorder %s19, 3
    %p36 = por %p34, %p35
    %p37 = scmp.ne.s32.totalorder %s29, %s32
    %p38 = scmp.eq.s32.totalorder %s19, 0
    %p39 = por %p37, %p38
    %p40 = scmp.ne.s32.totalorder %s29, %s32
    %p41 = scmp.eq.s32.totalorder %s24, 3
    %p42 = por %p40, %p41
    %p43 = scmp.ne.s32.totalorder %s32, %s33
    %p44 = scmp.eq.s32.totalorder %s24, 0
    %p45 = por %p43, %p44
    %p46 = scmp.ne.s32.totalorder %s32, %s33
    %p47 = scmp.eq.s32.totalorder %s25, 3
    %p48 = por %p46, %p47
    %p50 = scmp.ne.s32.totalorder %s33, %s49
    %p51 = scmp.eq.s32.totalorder %s25, 0
    %p52 = por %p50, %p51
    %s54 = sadd.s32 %s53, 1
    %p57 = scmp.eq.s32.totalorder %s19, 3
    %p58 = scmp.ne.s32.totalorder %s53, %s55
    %p59 = scmp.eq.s32.totalorder %s19, 0
    %p60 = por %p58, %p59
    %p61 = scmp.ne.s32.totalorder %s53, %s55
    %p62 = scmp.eq.s32.totalorder %s24, 3
    %p63 = por %p61, %p62
    %p64 = scmp.ne.s32.totalorder %s55, %s56
    %p65 = scmp.eq.s32.totalorder %s24, 0
    %p66 = por %p64, %p65
    %p67 = scmp.ne.s32.totalorder %s55, %s56
    %p68 = scmp.eq.s32.totalorder %s25, 3
    %p69 = por %p67, %p68
    %p71 = scmp.ne.s32.totalorder %s56, %s70
    %p72 = scmp.eq.s32.totalorder %s25, 0
    %p73 = por %p71, %p72
    %s75 = sadd.s32 %s74, 1
    %p78 = scmp.eq.s32.totalorder %s19, 3
    %p79 = scmp.ne.s32.totalorder %s74, %s76
    %p80 = scmp.eq.s32.totalorder %s19, 0
    %p81 = por %p79, %p80
    %p82 = scmp.ne.s32.totalorder %s74, %s76
    %p83 = scmp.eq.s32.totalorder %s24, 3
    %p84 = por %p82, %p83
    %p85 = scmp.ne.s32.totalorder %s76, %s77
    %p86 = scmp.eq.s32.totalorder %s24, 0
    %p87 = por %p85, %p86
    %p88 = scmp.ne.s32.totalorder %s76, %s77
    %p89 = scmp.eq.s32.totalorder %s25, 3
    %p90 = por %p88, %p89
    %p92 = scmp.ne.s32.totalorder %s77, %s91
    %p93 = scmp.eq.s32.totalorder %s25, 0
    %p94 = por %p92, %p93
    %s96 = sadd.s32 %s95, 1
    %p99 = scmp.eq.s32.totalorder %s19, 3
    %p100 = scmp.ne.s32.totalorder %s95, %s97
    %p101 = scmp.eq.s32.totalorder %s19, 0
    %p102 = por %p100, %p101
    %p103 = scmp.ne.s32.totalorder %s95, %s97
    %p104 = scmp.eq.s32.totalorder %s24, 3
    %p105 = por %p103, %p104
    %p106 = scmp.ne.s32.totalorder %s97, %s98
    %p107 = scmp.eq.s32.totalorder %s24, 0
    %p108 = por %p106, %p107
    %p109 = scmp.ne.s32.totalorder %s97, %s98
    %p110 = scmp.eq.s32.totalorder %s25, 3
    %p111 = por %p109, %p110
    %p113 = scmp.ne.s32.totalorder %s98, %s112
    %p114 = scmp.eq.s32.totalorder %s25, 0
    %p115 = por %p113, %p114
    %s117 = sadd.s32 %s116, 1
    %p120 = scmp.eq.s32.totalorder %s19, 3
    %p121 = scmp.ne.s32.totalorder %s116, %s118
    %p122 = scmp.eq.s32.totalorder %s19, 0
    %p123 = por %p121, %p122
    %p124 = scmp.ne.s32.totalorder %s116, %s118
    %p125 = scmp.eq.s32.totalorder %s24, 3
    %p126 = por %p124, %p125
    %p127 = scmp.ne.s32.totalorder %s118, %s119
    %p128 = scmp.eq.s32.totalorder %s24, 0
    %p129 = por %p127, %p128
    %p130 = scmp.ne.s32.totalorder %s118, %s119
    %p131 = scmp.eq.s32.totalorder %s25, 3
    %p132 = por %p130, %p131
    %p134 = scmp.ne.s32.totalorder %s119, %s133
    %p135 = scmp.eq.s32.totalorder %s25, 0
    %p136 = por %p134, %p135
    %s137 = ssub.s32 %s19, %s26
    %p138 = scmp.eq.s32.totalorder %s137, 0
    %s140 = sadd.s32 %s139, 1
    %s141 = scalar_select %p138, %s139, %s140
    %p144 = pneg %p138
    %p145 = scmp.eq.s32.totalorder %s19, 3
    %p146 = por %p144, %p145
    %p147 = scmp.ne.s32.totalorder %s139, %s142
    %p148 = scmp.eq.s32.totalorder %s19, 0
    %p149 = por %p147, %p148
    %p150 = scmp.ne.s32.totalorder %s139, %s142
    %p151 = scmp.eq.s32.totalorder %s24, 3
    %p152 = por %p150, %p151
    %p153 = scmp.ne.s32.totalorder %s142, %s143
    %p154 = scmp.eq.s32.totalorder %s24, 0
    %p155 = por %p153, %p154
    %p156 = scmp.ne.s32.totalorder %s142, %s143
    %p157 = scmp.eq.s32.totalorder %s25, 3
    %p158 = por %p156, %p157
    %p160 = scmp.ne.s32.totalorder %s143, %s159
    %p161 = scmp.eq.s32.totalorder %s25, 0
    %p162 = por %p160, %p161
    %s164 = sadd.s32 %s163, 1
    %p167 = scmp.eq.s32.totalorder %s19, 3
    %p168 = scmp.ne.s32.totalorder %s163, %s165
    %p169 = scmp.eq.s32.totalorder %s19, 0
    %p170 = por %p168, %p169
    %p171 = scmp.ne.s32.totalorder %s163, %s165
    %p172 = scmp.eq.s32.totalorder %s24, 3
    %p173 = por %p171, %p172
    %p174 = scmp.ne.s32.totalorder %s165, %s166
    %p175 = scmp.eq.s32.totalorder %s24, 0
    %p176 = por %p174, %p175
    %p177 = scmp.ne.s32.totalorder %s165, %s166
    %p178 = scmp.eq.s32.totalorder %s25, 3
    %p179 = por %p177, %p178
    %p181 = scmp.ne.s32.totalorder %s166, %s180
    %p182 = scmp.eq.s32.totalorder %s25, 0
    %p183 = por %p181, %p182
    %s185 = sadd.s32 %s184, 1
    %p188 = scmp.eq.s32.totalorder %s19, 3
    %p189 = scmp.ne.s32.totalorder %s184, %s186
    %p190 = scmp.eq.s32.totalorder %s19, 0
    %p191 = por %p189, %p190
    %p192 = scmp.ne.s32.totalorder %s184, %s186
    %p193 = scmp.eq.s32.totalorder %s24, 3
    %p194 = por %p192, %p193
    %p195 = scmp.ne.s32.totalorder %s186, %s187
    %p196 = scmp.eq.s32.totalorder %s24, 0
    %p197 = por %p195, %p196
    %p198 = scmp.ne.s32.totalorder %s186, %s187
    %p199 = scmp.eq.s32.totalorder %s25, 3
    %p200 = por %p198, %p199
    %p202 = scmp.ne.s32.totalorder %s187, %s201
    %p203 = scmp.eq.s32.totalorder %s25, 0
    %p204 = por %p202, %p203
    %s206 = sadd.s32 %s205, 1
    %p209 = scmp.eq.s32.totalorder %s19, 3
    %p210 = scmp.ne.s32.totalorder %s205, %s207
    %p211 = scmp.eq.s32.totalorder %s19, 0
    %p212 = por %p210, %p211
    %p213 = scmp.ne.s32.totalorder %s205, %s207
    %p214 = scmp.eq.s32.totalorder %s24, 3
    %p215 = por %p213, %p214
    %p216 = scmp.ne.s32.totalorder %s207, %s208
    %p217 = scmp.eq.s32.totalorder %s24, 0
    %p218 = por %p216, %p217
    %p219 = scmp.ne.s32.totalorder %s207, %s208
    %p220 = scmp.eq.s32.totalorder %s25, 3
    %p221 = por %p219, %p220
    %p223 = scmp.ne.s32.totalorder %s208, %s222
    %p224 = scmp.eq.s32.totalorder %s25, 0
    %p225 = por %p223, %p224
    %s227 = sadd.s32 %s226, 1
    %p230 = scmp.eq.s32.totalorder %s19, 3
    %p231 = scmp.ne.s32.totalorder %s226, %s228
    %p232 = scmp.eq.s32.totalorder %s19, 0
    %p233 = por %p231, %p232
    %p234 = scmp.ne.s32.totalorder %s226, %s228
    %p235 = scmp.eq.s32.totalorder %s24, 3
    %p236 = por %p234, %p235
    %p237 = scmp.ne.s32.totalorder %s228, %s229
    %p238 = scmp.eq.s32.totalorder %s24, 0
    %p239 = por %p237, %p238
    %p240 = scmp.ne.s32.totalorder %s228, %s229
    %p241 = scmp.eq.s32.totalorder %s25, 3
    %p242 = por %p240, %p241
    %p244 = scmp.ne.s32.totalorder %s229, %s243
    %p245 = scmp.eq.s32.totalorder %s25, 0
    %p246 = por %p244, %p245
    %s247 = ssub.s32 %s19, %s26
    %p248 = scmp.eq.s32.totalorder %s247, 0
    %s250 = sadd.s32 %s249, 1
    %s251 = scalar_select %p248, %s249, %s250
    %p254 = pneg %p248
    %p255 = scmp.eq.s32.totalorder %s19, 3
    %p256 = por %p254, %p255
    %p257 = scmp.ne.s32.totalorder %s249, %s252
    %p258 = scmp.eq.s32.totalorder %s19, 0
    %p259 = por %p257, %p258
    %p260 = scmp.ne.s32.totalorder %s249, %s252
    %p261 = scmp.eq.s32.totalorder %s24, 3
    %p262 = por %p260, %p261
    %p263 = scmp.ne.s32.totalorder %s252, %s253
    %p264 = scmp.eq.s32.totalorder %s24, 0
    %p265 = por %p263, %p264
    %p266 = scmp.ne.s32.totalorder %s252, %s253
    %p267 = scmp.eq.s32.totalorder %s25, 3
    %p268 = por %p266, %p267
    %p270 = scmp.ne.s32.totalorder %s253, %s269
    %p271 = scmp.eq.s32.totalorder %s25, 0
    %p272 = por %p270, %p271
    %s273 = ssub.s32 %s19, %s26
    %p274 = scmp.eq.s32.totalorder %s273, 0
    %s276 = sadd.s32 %s275, 1
    %s277 = scalar_select %p274, %s275, %s276
    %p280 = pneg %p274
    %p281 = scmp.eq.s32.totalorder %s19, 3
    %p282 = por %p280, %p281
    %p283 = scmp.ne.s32.totalorder %s275, %s278
    %p284 = scmp.eq.s32.totalorder %s19, 0
    %p285 = por %p283, %p284
    %p286 = scmp.ne.s32.totalorder %s275, %s278
    %p287 = scmp.eq.s32.totalorder %s24, 3
    %p288 = por %p286, %p287
    %p289 = scmp.ne.s32.totalorder %s278, %s279
    %p290 = scmp.eq.s32.totalorder %s24, 0
    %p291 = por %p289, %p290
    %p292 = scmp.ne.s32.totalorder %s278, %s279
    %p293 = scmp.eq.s32.totalorder %s25, 3
    %p294 = por %p292, %p293
    %p296 = scmp.ne.s32.totalorder %s279, %s295
    %p297 = scmp.eq.s32.totalorder %s25, 0
    %p298 = por %p296, %p297
    %s299 = ssub.s32 %s19, %s26
    %p300 = scmp.eq.s32.totalorder %s299, 0
    %s302 = sadd.s32 %s301, 1
    %s303 = scalar_select %p300, %s301, %s302
    %p306 = pneg %p300
    %p307 = scmp.eq.s32.totalorder %s19, 3
    %p308 = por %p306, %p307
    %p309 = scmp.ne.s32.totalorder %s301, %s304
    %p310 = scmp.eq.s32.totalorder %s19, 0
    %p311 = por %p309, %p310
    %p312 = scmp.ne.s32.totalorder %s301, %s304
    %p313 = scmp.eq.s32.totalorder %s24, 3
    %p314 = por %p312, %p313
    %p315 = scmp.ne.s32.totalorder %s304, %s305
    %p316 = scmp.eq.s32.totalorder %s24, 0
    %p317 = por %p315, %p316
    %p318 = scmp.ne.s32.totalorder %s304, %s305
    %p319 = scmp.eq.s32.totalorder %s25, 3
    %p320 = por %p318, %p319
    %p322 = scmp.ne.s32.totalorder %s305, %s321
    %p323 = scmp.eq.s32.totalorder %s25, 0
    %p324 = por %p322, %p323
    %p325 = scmp.le.s32.totalorder 1, %s19
    %p326 = scmp.lt.s32.totalorder %s19, 5
    %p327 = pnand %p325, %p326
    %p328 = pneg %p327
    // Predicated region
    $region9: #{vae_forward.1} parent=5 // pred_check
      _
    $region10: #{vae_forward.1} parent=5 // pred_check_branch
      %330 = sbr.rel (%p327) target = $region12
    $region11: #{vae_forward.1} parent=5 // pred_region
      %s331 = ssub.s32 %s19, 1
      // Predicated region
      $region13: #{vae_forward.1} parent=11 // pred_check
        %p332 = pneg %p66
      $region14: #{vae_forward.1} parent=11 // pred_check_branch
        %334 = sbr.rel (%p332) target = $region16
      $region15: #{vae_forward.1} parent=11 // pred_region
        _
      $region16: #{vae_forward.1} parent=11 // pred_fallthru
        _
      // Predicated region
      $region17: #{vae_forward.1} parent=11 // pred_check
        %p335 = pneg %p87
      $region18: #{vae_forward.1} parent=11 // pred_check_branch
        %337 = sbr.rel (%p335) target = $region20
      $region19: #{vae_forward.1} parent=11 // pred_region
        _
      $region20: #{vae_forward.1} parent=11 // pred_fallthru
        _
      // Predicated region
      $region21: #{vae_forward.1} parent=11 // pred_check
        %p338 = pneg %p108
      $region22: #{vae_forward.1} parent=11 // pred_check_branch
        %340 = sbr.rel (%p338) target = $region24
      $region23: #{vae_forward.1} parent=11 // pred_region
        _
      $region24: #{vae_forward.1} parent=11 // pred_fallthru
        _
      // Predicated region
      $region25: #{vae_forward.1} parent=11 // pred_check
        %p341 = pneg %p129
      $region26: #{vae_forward.1} parent=11 // pred_check_branch
        %343 = sbr.rel (%p341) target = $region28
      $region27: #{vae_forward.1} parent=11 // pred_region
        _
      $region28: #{vae_forward.1} parent=11 // pred_fallthru
        _
      // Predicated region
      $region29: #{vae_forward.1} parent=11 // pred_check
        %p344 = pneg %p176
      $region30: #{vae_forward.1} parent=11 // pred_check_branch
        %346 = sbr.rel (%p344) target = $region32
      $region31: #{vae_forward.1} parent=11 // pred_region
        _
      $region32: #{vae_forward.1} parent=11 // pred_fallthru
        _
      // Predicated region
      $region33: #{vae_forward.1} parent=11 // pred_check
        %p347 = pneg %p197
      $region34: #{vae_forward.1} parent=11 // pred_check_branch
        %349 = sbr.rel (%p347) target = $region36
      $region35: #{vae_forward.1} parent=11 // pred_region
        _
      $region36: #{vae_forward.1} parent=11 // pred_fallthru
        _
      // Predicated region
      $region37: #{vae_forward.1} parent=11 // pred_check
        %p350 = pneg %p218
      $region38: #{vae_forward.1} parent=11 // pred_check_branch
        %352 = sbr.rel (%p350) target = $region40
      $region39: #{vae_forward.1} parent=11 // pred_region
        _
      $region40: #{vae_forward.1} parent=11 // pred_fallthru
        _
      // Predicated region
      $region41: #{vae_forward.1} parent=11 // pred_check
        %p353 = pneg %p239
      $region42: #{vae_forward.1} parent=11 // pred_check_branch
        %355 = sbr.rel (%p353) target = $region44
      $region43: #{vae_forward.1} parent=11 // pred_region
        _
      $region44: #{vae_forward.1} parent=11 // pred_fallthru
        _
    $region12: #{vae_forward.1} parent=5 // pred_fallthru
      _
    %p356 = scmp.lt.s32.totalorder %s19, 4
    // Predicated region
    $region45: #{vae_forward.1} parent=5 // pred_check
      %p357 = pneg %p356
    $region46: #{vae_forward.1} parent=5 // pred_check_branch
      %359 = sbr.rel (%p357) target = $region48
    $region47: #{vae_forward.1} parent=5 // pred_region
      // Predicated region
      $region49: #{vae_forward.1} parent=47 // pred_check
        %p360 = pneg %p39
      $region50: #{vae_forward.1} parent=47 // pred_check_branch
        %362 = sbr.rel (%p360) target = $region52
      $region51: #{vae_forward.1} parent=47 // pred_region
        %s363 = smul.u32 32, %s19
        %p364 = scmp.lt.s32.totalorder %s363, 127
        %s365 = scalar_select %p364, %s363, 127
        %s366 = smul.addr %s365, 4
        %s367 = scalar_lea.vmem %s0, %s366
        %s368 = smul.u32 32, %s19
      $region52: #{vae_forward.1} parent=47 // pred_fallthru
        _
      // Predicated region
      $region53: #{vae_forward.1} parent=47 // pred_check
        %p369 = pneg %p149
      $region54: #{vae_forward.1} parent=47 // pred_check_branch
        %371 = sbr.rel (%p369) target = $region56
      $region55: #{vae_forward.1} parent=47 // pred_region
        %s372 = smul.u32 32, %s19
        %p373 = scmp.lt.s32.totalorder %s372, 127
        %s374 = scalar_select %p373, %s372, 127
        %s375 = smul.addr %s374, 8
        %s376 = scalar_lea.vmem %s5, %s375
        %s377 = smul.u32 32, %s19
      $region56: #{vae_forward.1} parent=47 // pred_fallthru
        _
    $region48: #{vae_forward.1} parent=5 // pred_fallthru
      _
    %p378 = scmp.le.s32.totalorder 1, %s19
    %p379 = scmp.lt.s32.totalorder %s19, 5
    %p380 = pnand %p378, %p379
    %p381 = pneg %p380
    // Predicated region
    $region57: #{vae_forward.1} parent=5 // pred_check
      _
    $region58: #{vae_forward.1} parent=5 // pred_check_branch
      %383 = sbr.rel (%p380) target = $region60
    $region59: #{vae_forward.1} parent=5 // pred_region
      %s384 = ssub.s32 %s19, 1
      %s385 = smul.u32 32, %s24
      %p386 = scmp.lt.s32.totalorder %s385, 127
      %s387 = scalar_select %p386, %s385, 127
      %s388 = smul.addr %s387, 4
      %s389 = scalar_lea.vmem %s0, %s388
      %p390 = pneg %p45
      %p391 = pneg %p42
      %p392 = pneg %p66
      %p393 = pneg %p63
      %p394 = pneg %p87
      %p395 = pneg %p84
      %p396 = pneg %p108
      %p397 = pneg %p105
      %p398 = pneg %p129
      %p399 = pneg %p126
      %s400 = smul.u32 32, %s24
      %p401 = scmp.lt.s32.totalorder %s400, 127
      %s402 = scalar_select %p401, %s400, 127
      %s403 = smul.addr %s402, 8
      %s404 = scalar_lea.vmem %s5, %s403
      %p405 = pneg %p155
      %p406 = pneg %p152
      %p407 = pneg %p176
      %p408 = pneg %p173
      %p409 = pneg %p197
      %p410 = pneg %p194
      %p411 = pneg %p218
      %p412 = pneg %p215
      %p413 = pneg %p239
      %p414 = pneg %p236
      %p415 = pneg %p265
      %p416 = pneg %p262
      %s417 = smul.u32 32, %s24
      %p418 = scmp.lt.s32.totalorder %s417, 127
      %s419 = scalar_select %p418, %s417, 127
      %s420 = smul.addr %s419, 4
      %s421 = scalar_lea.vmem %s10, %s420
      %p422 = pneg %p291
      %p423 = pneg %p288
      %s424 = smul.u32 32, %s24
      %p425 = scmp.lt.s32.totalorder %s424, 127
      %s426 = scalar_select %p425, %s424, 127
      %s427 = smul.addr %s426, 8
      %s428 = scalar_lea.vmem %s11, %s427
      %p429 = pneg %p317
      %p430 = pneg %p314
      %s431 = smul.u32 32, %s24
      %p432 = scmp.lt.s32.totalorder %s431, 127
      %s433 = scalar_select %p432, %s431, 127
      %s434 = smul.addr %s433, 8
      %s435 = scalar_lea.vmem %s12, %s434
      %s436 = smul.u32 32, %s24
      %p437 = scmp.lt.s32.totalorder %s436, 127
      %s438 = scalar_select %p437, %s436, 127
      %s439 = smul.addr %s438, 4
      %s440 = scalar_lea.vmem %s0, %s439
      %s441 = smul.u32 32, %s24
      %s442 = smul.u32 32, %s24
      %p443 = scmp.lt.s32.totalorder %s442, 127
      %s444 = scalar_select %p443, %s442, 127
      %s445 = smul.addr %s444, 8
      %s446 = scalar_lea.vmem %s5, %s445
      %s447 = smul.u32 32, %s24
      %s448 = smul.u32 32, %s24
      %p449 = scmp.lt.s32.totalorder %s448, 127
      %s450 = scalar_select %p449, %s448, 127
      %s451 = smul.addr %s450, 4
      %s452 = scalar_lea.vmem %s10, %s451
      %s453 = smul.u32 32, %s24
      %s454 = smul.u32 32, %s24
      %p455 = scmp.lt.s32.totalorder %s454, 127
      %s456 = scalar_select %p455, %s454, 127
      %s457 = smul.addr %s456, 8
      %s458 = scalar_lea.vmem %s11, %s457
      %s459 = smul.u32 32, %s24
      %s460 = smul.u32 32, %s24
      %p461 = scmp.lt.s32.totalorder %s460, 127
      %s462 = scalar_select %p461, %s460, 127
      %s463 = smul.addr %s462, 8
      %s464 = scalar_lea.vmem %s12, %s463
      %s465 = smul.u32 32, %s24
      %v467 = vld [vmem:[%s440] sm:$0xf]
      %v468 = vld [vmem:[%s440 + $0x4] sm:$0xf]
      %v469 = vld [vmem:[%s440 + $0x8] sm:$0xf]
      %v470 = vld [vmem:[%s440 + $0xc] sm:$0xf]
      %v471 = vld [vmem:[%s440 + $0x10] sm:$0xf]
      %v472 = vld [vmem:[%s440 + $0x14] sm:$0xf]
      %v473 = vld [vmem:[%s440 + $0x18] sm:$0xf]
      %v474 = vld [vmem:[%s440 + $0x1c] sm:$0xf]
      %v475 = vld [vmem:[%s440 + $0x20] sm:$0xf]
      %v476 = vld [vmem:[%s440 + $0x24] sm:$0xf]
      %v477 = vld [vmem:[%s440 + $0x28] sm:$0xf]
      %v478 = vld [vmem:[%s440 + $0x2c] sm:$0xf]
      %v479 = vld [vmem:[%s440 + $0x30] sm:$0xf]
      %v480 = vld [vmem:[%s440 + $0x34] sm:$0xf]
      %v481 = vld [vmem:[%s440 + $0x38] sm:$0xf]
      %v482 = vld [vmem:[%s440 + $0x3c] sm:$0xf]
      %v483 = vld [vmem:[%s440 + $0x40] sm:$0xf]
      %v484 = vld [vmem:[%s440 + $0x44] sm:$0xf]
      %v485 = vld [vmem:[%s440 + $0x48] sm:$0xf]
      %v486 = vld [vmem:[%s440 + $0x4c] sm:$0xf]
      %v487 = vld [vmem:[%s440 + $0x50] sm:$0xf]
      %v488 = vld [vmem:[%s440 + $0x54] sm:$0xf]
      %v489 = vld [vmem:[%s440 + $0x58] sm:$0xf]
      %v490 = vld [vmem:[%s440 + $0x5c] sm:$0xf]
      %v491 = vld [vmem:[%s440 + $0x60] sm:$0xf]
      %v492 = vld [vmem:[%s440 + $0x64] sm:$0xf]
      %v493 = vld [vmem:[%s440 + $0x68] sm:$0xf]
      %v494 = vld [vmem:[%s440 + $0x6c] sm:$0xf]
      %v495 = vld [vmem:[%s440 + $0x70] sm:$0xf]
      %v496 = vld [vmem:[%s440 + $0x74] sm:$0xf]
      %v497 = vld [vmem:[%s440 + $0x78] sm:$0xf]
      %v498 = vld [vmem:[%s440 + $0x7c] sm:$0xf]
      %v499 = vld [vmem:[%s1] sm:$0xf]
      %v500 = vld [vmem:[%s1 + $0x4] sm:$0xf]
      %v501 = vld [vmem:[%s1 + $0x8] sm:$0xf]
      %v502 = vld [vmem:[%s1 + $0xc] sm:$0xf]
      %v503 = vld [vmem:[%s1 + $0x10] sm:$0xf]
      %v504 = vld [vmem:[%s1 + $0x14] sm:$0xf]
      %v505 = vld [vmem:[%s1 + $0x18] sm:$0xf]
      %v506 = vld [vmem:[%s1 + $0x1c] sm:$0xf]
      %v507 = vld [vmem:[%s1 + $0x20] sm:$0xf]
      %v508 = vld [vmem:[%s1 + $0x24] sm:$0xf]
      %v509 = vld [vmem:[%s1 + $0x28] sm:$0xf]
      %v510 = vld [vmem:[%s1 + $0x2c] sm:$0xf]
      %v511 = vld [vmem:[%s1 + $0x30] sm:$0xf]
      %v512 = vld [vmem:[%s1 + $0x34] sm:$0xf]
      %v513 = vld [vmem:[%s1 + $0x38] sm:$0xf]
      %v514 = vld [vmem:[%s1 + $0x3c] sm:$0xf]
      %v515 = vld [vmem:[%s2] sm:$0x1]
      %v517 = vlaneseq
      %v518 = vshrl.u32 %v517, 7
      %v519 = vsub.s32 0, %v518
      %v520 = vrot.slane %v515, %v519
      %v554 = vunpack.c.l.b16 %v467
      %v555 = vunpack.c.l.b16 %v468
      %v556 = vunpack.c.l.b16 %v469
      %v557 = vunpack.c.l.b16 %v470
      %v558 = vunpack.c.l.b16 %v471
      %v559 = vunpack.c.l.b16 %v472
      %v560 = vunpack.c.l.b16 %v473
      %v561 = vunpack.c.l.b16 %v474
      %v562 = vunpack.c.l.b16 %v475
      %v563 = vunpack.c.l.b16 %v476
      %v564 = vunpack.c.l.b16 %v477
      %v565 = vunpack.c.l.b16 %v478
      %v566 = vunpack.c.l.b16 %v479
      %v567 = vunpack.c.l.b16 %v480
      %v568 = vunpack.c.l.b16 %v481
      %v569 = vunpack.c.l.b16 %v482
      %v570 = vunpack.c.l.b16 %v483
      %v571 = vunpack.c.l.b16 %v484
      %v572 = vunpack.c.l.b16 %v485
      %v573 = vunpack.c.l.b16 %v486
      %v574 = vunpack.c.l.b16 %v487
      %v575 = vunpack.c.l.b16 %v488
      %v576 = vunpack.c.l.b16 %v489
      %v577 = vunpack.c.l.b16 %v490
      %v578 = vunpack.c.l.b16 %v491
      %v579 = vunpack.c.l.b16 %v492
      %v580 = vunpack.c.l.b16 %v493
      %v581 = vunpack.c.l.b16 %v494
      %v582 = vunpack.c.l.b16 %v495
      %v583 = vunpack.c.l.b16 %v496
      %v584 = vunpack.c.l.b16 %v497
      %v585 = vunpack.c.l.b16 %v498
      %v586 = vpack.c.b16 %v555, %v554
      %v587 = vpack.c.b16 %v557, %v556
      %v588 = vpack.c.b16 %v559, %v558
      %v589 = vpack.c.b16 %v561, %v560
      %v590 = vpack.c.b16 %v563, %v562
      %v591 = vpack.c.b16 %v565, %v564
      %v592 = vpack.c.b16 %v567, %v566
      %v593 = vpack.c.b16 %v569, %v568
      %v594 = vpack.c.b16 %v571, %v570
      %v595 = vpack.c.b16 %v573, %v572
      %v596 = vpack.c.b16 %v575, %v574
      %v597 = vpack.c.b16 %v577, %v576
      %v598 = vpack.c.b16 %v579, %v578
      %v599 = vpack.c.b16 %v581, %v580
      %v600 = vpack.c.b16 %v583, %v582
      %v601 = vpack.c.b16 %v585, %v584
      %v634 = vunpack.c.l.b16 %v499
      %v635 = vunpack.c.l.b16 %v500
      %v636 = vunpack.c.l.b16 %v501
      %v637 = vunpack.c.l.b16 %v502
      %v638 = vunpack.c.l.b16 %v503
      %v639 = vunpack.c.l.b16 %v504
      %v640 = vunpack.c.l.b16 %v505
      %v641 = vunpack.c.l.b16 %v506
      %v642 = vunpack.c.l.b16 %v507
      %v643 = vunpack.c.l.b16 %v508
      %v644 = vunpack.c.l.b16 %v509
      %v645 = vunpack.c.l.b16 %v510
      %v646 = vunpack.c.l.b16 %v511
      %v647 = vunpack.c.l.b16 %v512
      %v648 = vunpack.c.l.b16 %v513
      %v649 = vunpack.c.l.b16 %v514
      %v650 = vpack.c.b16 %v635, %v634
      %v651 = vpack.c.b16 %v637, %v636
      %v652 = vpack.c.b16 %v639, %v638
      %v653 = vpack.c.b16 %v641, %v640
      %v654 = vpack.c.b16 %v643, %v642
      %v655 = vpack.c.b16 %v645, %v644
      %v656 = vpack.c.b16 %v647, %v646
      %v657 = vpack.c.b16 %v649, %v648
      %666 = vmatprep.subr.bf16.mxu0 0
      %667 = vmatpush1.bf16.msra.mxu0 %v657
      %668 = vmatprep.subr.bf16.mxu0 0
      %669 = vmatpush1.bf16.msra.mxu0 %v656
      %670 = vmatprep.subr.bf16.mxu0 0
      %671 = vmatpush1.bf16.msra.mxu0 %v655
      %672 = vmatprep.subr.bf16.mxu0 0
      %673 = vmatpush1.bf16.msra.mxu0 %v654
      %674 = vmatprep.subr.bf16.mxu0 0
      %675 = vmatpush1.bf16.msra.mxu0 %v653
      %676 = vmatprep.subr.bf16.mxu0 0
      %677 = vmatpush1.bf16.msra.mxu0 %v652
      %678 = vmatprep.subr.bf16.mxu0 0
      %679 = vmatpush1.bf16.msra.mxu0 %v651
      %680 = vmatprep.subr.bf16.mxu0 0
      %681 = vmatpush1.bf16.msra.mxu0 %v650
      %682 = vmatprep.subr.bf16.mxu0 0
      %683 = vmatpush2.bf16.msra.mxu0 0
      %684 = vmatprep.subr.bf16.mxu0 0
      %685 = vmatpush2.bf16.msra.mxu0 0
      %686 = vmatprep.subr.bf16.mxu0 0
      %687 = vmatpush2.bf16.msra.mxu0 0
      %688 = vmatprep.subr.bf16.mxu0 0
      %689 = vmatpush2.bf16.msra.mxu0 0
      %690 = vmatprep.subr.bf16.mxu0 0
      %691 = vmatpush2.bf16.msra.mxu0 0
      %692 = vmatprep.subr.bf16.mxu0 0
      %693 = vmatpush2.bf16.msra.mxu0 0
      %694 = vmatprep.subr.bf16.mxu0 0
      %695 = vmatpush2.bf16.msra.mxu0 0
      %696 = vmatprep.subr.bf16.mxu0 0
      %697 = vmatpush2.bf16.msra.mxu0 0
      %698 = vmatprep.mubr.bf16.mxu0 0
      %699 = vmatmul.mubr.bf16.gmra.mxu0 %v586
      %v700 = vpop.f32.mrf.mxu0
      %v701 = vadd.f32 %v520, %v700
      %v702 = vpop.f32.mrf.mxu0
      %v703 = vpop.f32.mrf.mxu0
      %v704 = vadd.f32 %v520, %v703
      %v705 = vpop.f32.mrf.mxu0
      %706 = vmatprep.mubr.bf16.mxu0 0
      %707 = vmatmul.mubr.bf16.gmra.mxu0 %v587
      %v708 = vpop.f32.mrf.mxu0
      %v709 = vadd.f32 %v520, %v708
      %v710 = vpop.f32.mrf.mxu0
      %v711 = vpop.f32.mrf.mxu0
      %v712 = vadd.f32 %v520, %v711
      %v713 = vpop.f32.mrf.mxu0
      %714 = vmatprep.mubr.bf16.mxu0 0
      %715 = vmatmul.mubr.bf16.gmra.mxu0 %v588
      %v716 = vpop.f32.mrf.mxu0
      %v717 = vadd.f32 %v520, %v716
      %v718 = vpop.f32.mrf.mxu0
      %v719 = vpop.f32.mrf.mxu0
      %v720 = vadd.f32 %v520, %v719
      %v721 = vpop.f32.mrf.mxu0
      %722 = vmatprep.mubr.bf16.mxu0 0
      %723 = vmatmul.mubr.bf16.gmra.mxu0 %v589
      %v724 = vpop.f32.mrf.mxu0
      %v725 = vadd.f32 %v520, %v724
      %v726 = vpop.f32.mrf.mxu0
      %v727 = vpop.f32.mrf.mxu0
      %v728 = vadd.f32 %v520, %v727
      %v729 = vpop.f32.mrf.mxu0
      %730 = vmatprep.mubr.bf16.mxu0 0
      %731 = vmatmul.mubr.bf16.gmra.mxu0 %v590
      %v732 = vpop.f32.mrf.mxu0
      %v733 = vadd.f32 %v520, %v732
      %v734 = vpop.f32.mrf.mxu0
      %v735 = vpop.f32.mrf.mxu0
      %v736 = vadd.f32 %v520, %v735
      %v737 = vpop.f32.mrf.mxu0
      %738 = vmatprep.mubr.bf16.mxu0 0
      %739 = vmatmul.mubr.bf16.gmra.mxu0 %v591
      %v740 = vpop.f32.mrf.mxu0
      %v741 = vadd.f32 %v520, %v740
      %v742 = vpop.f32.mrf.mxu0
      %v743 = vpop.f32.mrf.mxu0
      %v744 = vadd.f32 %v520, %v743
      %v745 = vpop.f32.mrf.mxu0
      %746 = vmatprep.mubr.bf16.mxu0 0
      %747 = vmatmul.mubr.bf16.gmra.mxu0 %v592
      %v748 = vpop.f32.mrf.mxu0
      %v749 = vadd.f32 %v520, %v748
      %v750 = vpop.f32.mrf.mxu0
      %v751 = vpop.f32.mrf.mxu0
      %v752 = vadd.f32 %v520, %v751
      %v753 = vpop.f32.mrf.mxu0
      %754 = vmatprep.mubr.bf16.mxu0 0
      %755 = vmatmul.mubr.bf16.gmra.mxu0 %v593
      %v756 = vpop.f32.mrf.mxu0
      %v757 = vadd.f32 %v520, %v756
      %v758 = vpop.f32.mrf.mxu0
      %v759 = vpop.f32.mrf.mxu0
      %v760 = vadd.f32 %v520, %v759
      %v761 = vpop.f32.mrf.mxu0
      %762 = vmatprep.mubr.bf16.mxu0 0
      %763 = vmatmul.mubr.bf16.gmra.mxu0 %v594
      %v764 = vpop.f32.mrf.mxu0
      %v765 = vadd.f32 %v520, %v764
      %v766 = vpop.f32.mrf.mxu0
      %v767 = vpop.f32.mrf.mxu0
      %v768 = vadd.f32 %v520, %v767
      %v769 = vpop.f32.mrf.mxu0
      %770 = vmatprep.mubr.bf16.mxu0 0
      %771 = vmatmul.mubr.bf16.gmra.mxu0 %v595
      %v772 = vpop.f32.mrf.mxu0
      %v773 = vadd.f32 %v520, %v772
      %v774 = vpop.f32.mrf.mxu0
      %v775 = vpop.f32.mrf.mxu0
      %v776 = vadd.f32 %v520, %v775
      %v777 = vpop.f32.mrf.mxu0
      %778 = vmatprep.mubr.bf16.mxu0 0
      %779 = vmatmul.mubr.bf16.gmra.mxu0 %v596
      %v780 = vpop.f32.mrf.mxu0
      %v781 = vadd.f32 %v520, %v780
      %v782 = vpop.f32.mrf.mxu0
      %v783 = vpop.f32.mrf.mxu0
      %v784 = vadd.f32 %v520, %v783
      %v785 = vpop.f32.mrf.mxu0
      %786 = vmatprep.mubr.bf16.mxu0 0
      %787 = vmatmul.mubr.bf16.gmra.mxu0 %v597
      %v788 = vpop.f32.mrf.mxu0
      %v789 = vadd.f32 %v520, %v788
      %v790 = vpop.f32.mrf.mxu0
      %v791 = vpop.f32.mrf.mxu0
      %v792 = vadd.f32 %v520, %v791
      %v793 = vpop.f32.mrf.mxu0
      %794 = vmatprep.mubr.bf16.mxu0 0
      %795 = vmatmul.mubr.bf16.gmra.mxu0 %v598
      %v796 = vpop.f32.mrf.mxu0
      %v797 = vadd.f32 %v520, %v796
      %v798 = vpop.f32.mrf.mxu0
      %v799 = vpop.f32.mrf.mxu0
      %v800 = vadd.f32 %v520, %v799
      %v801 = vpop.f32.mrf.mxu0
      %802 = vmatprep.mubr.bf16.mxu0 0
      %803 = vmatmul.mubr.bf16.gmra.mxu0 %v599
      %v804 = vpop.f32.mrf.mxu0
      %v805 = vadd.f32 %v520, %v804
      %v806 = vpop.f32.mrf.mxu0
      %v807 = vpop.f32.mrf.mxu0
      %v808 = vadd.f32 %v520, %v807
      %v809 = vpop.f32.mrf.mxu0
      %810 = vmatprep.mubr.bf16.mxu0 0
      %811 = vmatmul.mubr.bf16.gmra.mxu0 %v600
      %v812 = vpop.f32.mrf.mxu0
      %v813 = vadd.f32 %v520, %v812
      %v814 = vpop.f32.mrf.mxu0
      %v815 = vpop.f32.mrf.mxu0
      %v816 = vadd.f32 %v520, %v815
      %v817 = vpop.f32.mrf.mxu0
      %818 = vmatprep.mubr.bf16.mxu0 0
      %819 = vmatmul.mubr.bf16.gmra.mxu0 %v601
      %v820 = vpop.f32.mrf.mxu0
      %v821 = vadd.f32 %v520, %v820
      %v822 = vpop.f32.mrf.mxu0
      %v823 = vpop.f32.mrf.mxu0
      %v824 = vadd.f32 %v520, %v823
      %v825 = vpop.f32.mrf.mxu0
      %826 = vdwg.mxu0
      %v827 = vmax.f32 %v701, 0.0
      %v828 = vmax.f32 %v704, 0.0
      %v829 = vmax.f32 %v709, 0.0
      %v830 = vmax.f32 %v712, 0.0
      %v831 = vmax.f32 %v717, 0.0
      %v832 = vmax.f32 %v720, 0.0
      %v833 = vmax.f32 %v725, 0.0
      %v834 = vmax.f32 %v728, 0.0
      %v835 = vmax.f32 %v733, 0.0
      %v836 = vmax.f32 %v736, 0.0
      %v837 = vmax.f32 %v741, 0.0
      %v838 = vmax.f32 %v744, 0.0
      %v839 = vmax.f32 %v749, 0.0
      %v840 = vmax.f32 %v752, 0.0
      %v841 = vmax.f32 %v757, 0.0
      %v842 = vmax.f32 %v760, 0.0
      %v843 = vmax.f32 %v765, 0.0
      %v844 = vmax.f32 %v768, 0.0
      %v845 = vmax.f32 %v773, 0.0
      %v846 = vmax.f32 %v776, 0.0
      %v847 = vmax.f32 %v781, 0.0
      %v848 = vmax.f32 %v784, 0.0
      %v849 = vmax.f32 %v789, 0.0
      %v850 = vmax.f32 %v792, 0.0
      %v851 = vmax.f32 %v797, 0.0
      %v852 = vmax.f32 %v800, 0.0
      %v853 = vmax.f32 %v805, 0.0
      %v854 = vmax.f32 %v808, 0.0
      %v855 = vmax.f32 %v813, 0.0
      %v856 = vmax.f32 %v816, 0.0
      %v857 = vmax.f32 %v821, 0.0
      %v858 = vmax.f32 %v824, 0.0
      %v859 = vpack.c.bf16 %v828, %v827
      %v860 = vpack.c.bf16 %v830, %v829
      %v861 = vpack.c.bf16 %v832, %v831
      %v862 = vpack.c.bf16 %v834, %v833
      %v863 = vpack.c.bf16 %v836, %v835
      %v864 = vpack.c.bf16 %v838, %v837
      %v865 = vpack.c.bf16 %v840, %v839
      %v866 = vpack.c.bf16 %v842, %v841
      %v867 = vpack.c.bf16 %v844, %v843
      %v868 = vpack.c.bf16 %v846, %v845
      %v869 = vpack.c.bf16 %v848, %v847
      %v870 = vpack.c.bf16 %v850, %v849
      %v871 = vpack.c.bf16 %v852, %v851
      %v872 = vpack.c.bf16 %v854, %v853
      %v873 = vpack.c.bf16 %v856, %v855
      %v874 = vpack.c.bf16 %v858, %v857
      %v875 = vld [vmem:[%s3] sm:$0xff]
      %v876 = vld [vmem:[%s3 + $0x8] sm:$0xff]
      %v877 = vld [vmem:[%s3 + $0x10] sm:$0xff]
      %v878 = vld [vmem:[%s3 + $0x18] sm:$0xff]
      %v879 = vld [vmem:[%s3 + $0x20] sm:$0xff]
      %v880 = vld [vmem:[%s3 + $0x28] sm:$0xff]
      %v881 = vld [vmem:[%s3 + $0x30] sm:$0xff]
      %v882 = vld [vmem:[%s3 + $0x38] sm:$0xff]
      %v883 = vld [vmem:[%s3 + $0x40] sm:$0xff]
      %v884 = vld [vmem:[%s3 + $0x48] sm:$0xff]
      %v885 = vld [vmem:[%s3 + $0x50] sm:$0xff]
      %v886 = vld [vmem:[%s3 + $0x58] sm:$0xff]
      %v887 = vld [vmem:[%s3 + $0x60] sm:$0xff]
      %v888 = vld [vmem:[%s3 + $0x68] sm:$0xff]
      %v889 = vld [vmem:[%s3 + $0x70] sm:$0xff]
      %v890 = vld [vmem:[%s3 + $0x78] sm:$0xff]
      %v891 = vld [vmem:[%s4] sm:$0x3]
      %v893 = vlaneseq
      %v894 = vshrl.u32 %v893, 7
      %v895 = vsub.s32 0, %v894
      %v896 = vrot.slane %v891, %v895
      %v897 = vlaneseq
      %v898 = vshrl.u32 %v897, 7
      %v899 = vsub.s32 1, %v898
      %v900 = vrot.slane %v891, %v899
      %v919 = vunpack.c.l.b16 %v875
      %v920 = vunpack.c.h.b16 %v875
      %v921 = vunpack.c.l.b16 %v876
      %v922 = vunpack.c.h.b16 %v876
      %v923 = vunpack.c.l.b16 %v877
      %v924 = vunpack.c.h.b16 %v877
      %v925 = vunpack.c.l.b16 %v878
      %v926 = vunpack.c.h.b16 %v878
      %v927 = vunpack.c.l.b16 %v879
      %v928 = vunpack.c.h.b16 %v879
      %v929 = vunpack.c.l.b16 %v880
      %v930 = vunpack.c.h.b16 %v880
      %v931 = vunpack.c.l.b16 %v881
      %v932 = vunpack.c.h.b16 %v881
      %v933 = vunpack.c.l.b16 %v882
      %v934 = vunpack.c.h.b16 %v882
      %v935 = vunpack.c.l.b16 %v883
      %v936 = vunpack.c.h.b16 %v883
      %v937 = vunpack.c.l.b16 %v884
      %v938 = vunpack.c.h.b16 %v884
      %v939 = vunpack.c.l.b16 %v885
      %v940 = vunpack.c.h.b16 %v885
      %v941 = vunpack.c.l.b16 %v886
      %v942 = vunpack.c.h.b16 %v886
      %v943 = vunpack.c.l.b16 %v887
      %v944 = vunpack.c.h.b16 %v887
      %v945 = vunpack.c.l.b16 %v888
      %v946 = vunpack.c.h.b16 %v888
      %v947 = vunpack.c.l.b16 %v889
      %v948 = vunpack.c.h.b16 %v889
      %v949 = vunpack.c.l.b16 %v890
      %v950 = vunpack.c.h.b16 %v890
      %v951 = vpack.c.b16 %v921, %v919
      %v952 = vpack.c.b16 %v922, %v920
      %v953 = vpack.c.b16 %v925, %v923
      %v954 = vpack.c.b16 %v926, %v924
      %v955 = vpack.c.b16 %v929, %v927
      %v956 = vpack.c.b16 %v930, %v928
      %v957 = vpack.c.b16 %v933, %v931
      %v958 = vpack.c.b16 %v934, %v932
      %v959 = vpack.c.b16 %v937, %v935
      %v960 = vpack.c.b16 %v938, %v936
      %v961 = vpack.c.b16 %v941, %v939
      %v962 = vpack.c.b16 %v942, %v940
      %v963 = vpack.c.b16 %v945, %v943
      %v964 = vpack.c.b16 %v946, %v944
      %v965 = vpack.c.b16 %v949, %v947
      %v966 = vpack.c.b16 %v950, %v948
      %983 = vmatprep.subr.bf16.mxu0 %v966
      %984 = vmatpush1.bf16.msra.mxu0 %v965
      %985 = vmatprep.subr.bf16.mxu0 %v964
      %986 = vmatpush1.bf16.msra.mxu0 %v963
      %987 = vmatprep.subr.bf16.mxu0 %v962
      %988 = vmatpush1.bf16.msra.mxu0 %v961
      %989 = vmatprep.subr.bf16.mxu0 %v960
      %990 = vmatpush1.bf16.msra.mxu0 %v959
      %991 = vmatprep.subr.bf16.mxu0 %v958
      %992 = vmatpush1.bf16.msra.mxu0 %v957
      %993 = vmatprep.subr.bf16.mxu0 %v956
      %994 = vmatpush1.bf16.msra.mxu0 %v955
      %995 = vmatprep.subr.bf16.mxu0 %v954
      %996 = vmatpush1.bf16.msra.mxu0 %v953
      %997 = vmatprep.subr.bf16.mxu0 %v952
      %998 = vmatpush1.bf16.msra.mxu0 %v951
      %999 = vmatprep.subr.bf16.mxu0 0
      %1000 = vmatpush2.bf16.msra.mxu0 0
      %1001 = vmatprep.subr.bf16.mxu0 0
      %1002 = vmatpush2.bf16.msra.mxu0 0
      %1003 = vmatprep.subr.bf16.mxu0 0
      %1004 = vmatpush2.bf16.msra.mxu0 0
      %1005 = vmatprep.subr.bf16.mxu0 0
      %1006 = vmatpush2.bf16.msra.mxu0 0
      %1007 = vmatprep.subr.bf16.mxu0 0
      %1008 = vmatpush2.bf16.msra.mxu0 0
      %1009 = vmatprep.subr.bf16.mxu0 0
      %1010 = vmatpush2.bf16.msra.mxu0 0
      %1011 = vmatprep.subr.bf16.mxu0 0
      %1012 = vmatpush2.bf16.msra.mxu0 0
      %1013 = vmatprep.subr.bf16.mxu0 0
      %1014 = vmatpush2.bf16.msra.mxu0 0
      %1015 = vmatprep.mubr.bf16.mxu0 0
      %1016 = vmatmul.mubr.bf16.gmra.mxu0 %v859
      %v1017 = vpop.f32.mrf.mxu0
      %v1018 = vadd.f32 %v896, %v1017
      %v1019 = vpop.f32.mrf.mxu0
      %v1020 = vadd.f32 %v900, %v1019
      %v1021 = vpop.f32.mrf.mxu0
      %v1022 = vadd.f32 %v896, %v1021
      %v1023 = vpop.f32.mrf.mxu0
      %v1024 = vadd.f32 %v900, %v1023
      %1025 = vmatprep.mubr.bf16.mxu0 0
      %1026 = vmatmul.mubr.bf16.gmra.mxu0 %v860
      %v1027 = vpop.f32.mrf.mxu0
      %v1028 = vadd.f32 %v896, %v1027
      %v1029 = vpop.f32.mrf.mxu0
      %v1030 = vadd.f32 %v900, %v1029
      %v1031 = vpop.f32.mrf.mxu0
      %v1032 = vadd.f32 %v896, %v1031
      %v1033 = vpop.f32.mrf.mxu0
      %v1034 = vadd.f32 %v900, %v1033
      %1035 = vmatprep.mubr.bf16.mxu0 0
      %1036 = vmatmul.mubr.bf16.gmra.mxu0 %v861
      %v1037 = vpop.f32.mrf.mxu0
      %v1038 = vadd.f32 %v896, %v1037
      %v1039 = vpop.f32.mrf.mxu0
      %v1040 = vadd.f32 %v900, %v1039
      %v1041 = vpop.f32.mrf.mxu0
      %v1042 = vadd.f32 %v896, %v1041
      %v1043 = vpop.f32.mrf.mxu0
      %v1044 = vadd.f32 %v900, %v1043
      %1045 = vmatprep.mubr.bf16.mxu0 0
      %1046 = vmatmul.mubr.bf16.gmra.mxu0 %v862
      %v1047 = vpop.f32.mrf.mxu0
      %v1048 = vadd.f32 %v896, %v1047
      %v1049 = vpop.f32.mrf.mxu0
      %v1050 = vadd.f32 %v900, %v1049
      %v1051 = vpop.f32.mrf.mxu0
      %v1052 = vadd.f32 %v896, %v1051
      %v1053 = vpop.f32.mrf.mxu0
      %v1054 = vadd.f32 %v900, %v1053
      %1055 = vmatprep.mubr.bf16.mxu0 0
      %1056 = vmatmul.mubr.bf16.gmra.mxu0 %v863
      %v1057 = vpop.f32.mrf.mxu0
      %v1058 = vadd.f32 %v896, %v1057
      %v1059 = vpop.f32.mrf.mxu0
      %v1060 = vadd.f32 %v900, %v1059
      %v1061 = vpop.f32.mrf.mxu0
      %v1062 = vadd.f32 %v896, %v1061
      %v1063 = vpop.f32.mrf.mxu0
      %v1064 = vadd.f32 %v900, %v1063
      %1065 = vmatprep.mubr.bf16.mxu0 0
      %1066 = vmatmul.mubr.bf16.gmra.mxu0 %v864
      %v1067 = vpop.f32.mrf.mxu0
      %v1068 = vadd.f32 %v896, %v1067
      %v1069 = vpop.f32.mrf.mxu0
      %v1070 = vadd.f32 %v900, %v1069
      %v1071 = vpop.f32.mrf.mxu0
      %v1072 = vadd.f32 %v896, %v1071
      %v1073 = vpop.f32.mrf.mxu0
      %v1074 = vadd.f32 %v900, %v1073
      %1075 = vmatprep.mubr.bf16.mxu0 0
      %1076 = vmatmul.mubr.bf16.gmra.mxu0 %v865
      %v1077 = vpop.f32.mrf.mxu0
      %v1078 = vadd.f32 %v896, %v1077
      %v1079 = vpop.f32.mrf.mxu0
      %v1080 = vadd.f32 %v900, %v1079
      %v1081 = vpop.f32.mrf.mxu0
      %v1082 = vadd.f32 %v896, %v1081
      %v1083 = vpop.f32.mrf.mxu0
      %v1084 = vadd.f32 %v900, %v1083
      %1085 = vmatprep.mubr.bf16.mxu0 0
      %1086 = vmatmul.mubr.bf16.gmra.mxu0 %v866
      %v1087 = vpop.f32.mrf.mxu0
      %v1088 = vadd.f32 %v896, %v1087
      %v1089 = vpop.f32.mrf.mxu0
      %v1090 = vadd.f32 %v900, %v1089
      %v1091 = vpop.f32.mrf.mxu0
      %v1092 = vadd.f32 %v896, %v1091
      %v1093 = vpop.f32.mrf.mxu0
      %v1094 = vadd.f32 %v900, %v1093
      %1095 = vmatprep.mubr.bf16.mxu0 0
      %1096 = vmatmul.mubr.bf16.gmra.mxu0 %v867
      %v1097 = vpop.f32.mrf.mxu0
      %v1098 = vadd.f32 %v896, %v1097
      %v1099 = vpop.f32.mrf.mxu0
      %v1100 = vadd.f32 %v900, %v1099
      %v1101 = vpop.f32.mrf.mxu0
      %v1102 = vadd.f32 %v896, %v1101
      %v1103 = vpop.f32.mrf.mxu0
      %v1104 = vadd.f32 %v900, %v1103
      %1105 = vmatprep.mubr.bf16.mxu0 0
      %1106 = vmatmul.mubr.bf16.gmra.mxu0 %v868
      %v1107 = vpop.f32.mrf.mxu0
      %v1108 = vadd.f32 %v896, %v1107
      %v1109 = vpop.f32.mrf.mxu0
      %v1110 = vadd.f32 %v900, %v1109
      %v1111 = vpop.f32.mrf.mxu0
      %v1112 = vadd.f32 %v896, %v1111
      %v1113 = vpop.f32.mrf.mxu0
      %v1114 = vadd.f32 %v900, %v1113
      %1115 = vmatprep.mubr.bf16.mxu0 0
      %1116 = vmatmul.mubr.bf16.gmra.mxu0 %v869
      %v1117 = vpop.f32.mrf.mxu0
      %v1118 = vadd.f32 %v896, %v1117
      %v1119 = vpop.f32.mrf.mxu0
      %v1120 = vadd.f32 %v900, %v1119
      %v1121 = vpop.f32.mrf.mxu0
      %v1122 = vadd.f32 %v896, %v1121
      %v1123 = vpop.f32.mrf.mxu0
      %v1124 = vadd.f32 %v900, %v1123
      %1125 = vmatprep.mubr.bf16.mxu0 0
      %1126 = vmatmul.mubr.bf16.gmra.mxu0 %v870
      %v1127 = vpop.f32.mrf.mxu0
      %v1128 = vadd.f32 %v896, %v1127
      %v1129 = vpop.f32.mrf.mxu0
      %v1130 = vadd.f32 %v900, %v1129
      %v1131 = vpop.f32.mrf.mxu0
      %v1132 = vadd.f32 %v896, %v1131
      %v1133 = vpop.f32.mrf.mxu0
      %v1134 = vadd.f32 %v900, %v1133
      %1135 = vmatprep.mubr.bf16.mxu0 0
      %1136 = vmatmul.mubr.bf16.gmra.mxu0 %v871
      %v1137 = vpop.f32.mrf.mxu0
      %v1138 = vadd.f32 %v896, %v1137
      %v1139 = vpop.f32.mrf.mxu0
      %v1140 = vadd.f32 %v900, %v1139
      %v1141 = vpop.f32.mrf.mxu0
      %v1142 = vadd.f32 %v896, %v1141
      %v1143 = vpop.f32.mrf.mxu0
      %v1144 = vadd.f32 %v900, %v1143
      %1145 = vmatprep.mubr.bf16.mxu0 0
      %1146 = vmatmul.mubr.bf16.gmra.mxu0 %v872
      %v1147 = vpop.f32.mrf.mxu0
      %v1148 = vadd.f32 %v896, %v1147
      %v1149 = vpop.f32.mrf.mxu0
      %v1150 = vadd.f32 %v900, %v1149
      %v1151 = vpop.f32.mrf.mxu0
      %v1152 = vadd.f32 %v896, %v1151
      %v1153 = vpop.f32.mrf.mxu0
      %v1154 = vadd.f32 %v900, %v1153
      %1155 = vmatprep.mubr.bf16.mxu0 0
      %1156 = vmatmul.mubr.bf16.gmra.mxu0 %v873
      %v1157 = vpop.f32.mrf.mxu0
      %v1158 = vadd.f32 %v896, %v1157
      %v1159 = vpop.f32.mrf.mxu0
      %v1160 = vadd.f32 %v900, %v1159
      %v1161 = vpop.f32.mrf.mxu0
      %v1162 = vadd.f32 %v896, %v1161
      %v1163 = vpop.f32.mrf.mxu0
      %v1164 = vadd.f32 %v900, %v1163
      %1165 = vmatprep.mubr.bf16.mxu0 0
      %1166 = vmatmul.mubr.bf16.gmra.mxu0 %v874
      %v1167 = vpop.f32.mrf.mxu0
      %v1168 = vadd.f32 %v896, %v1167
      %v1169 = vpop.f32.mrf.mxu0
      %v1170 = vadd.f32 %v900, %v1169
      %v1171 = vpop.f32.mrf.mxu0
      %v1172 = vadd.f32 %v896, %v1171
      %v1173 = vpop.f32.mrf.mxu0
      %v1174 = vadd.f32 %v900, %v1173
      %1175 = vdwg.mxu0
      %v1176 = vmul.f32 %v1020, 0.5
      %v1177 = vmul.f32 %v1024, 0.5
      %v1178 = vmul.f32 %v1030, 0.5
      %v1179 = vmul.f32 %v1034, 0.5
      %v1180 = vmul.f32 %v1040, 0.5
      %v1181 = vmul.f32 %v1044, 0.5
      %v1182 = vmul.f32 %v1050, 0.5
      %v1183 = vmul.f32 %v1054, 0.5
      %v1184 = vmul.f32 %v1060, 0.5
      %v1185 = vmul.f32 %v1064, 0.5
      %v1186 = vmul.f32 %v1070, 0.5
      %v1187 = vmul.f32 %v1074, 0.5
      %v1188 = vmul.f32 %v1080, 0.5
      %v1189 = vmul.f32 %v1084, 0.5
      %v1190 = vmul.f32 %v1090, 0.5
      %v1191 = vmul.f32 %v1094, 0.5
      %v1192 = vmul.f32 %v1100, 0.5
      %v1193 = vmul.f32 %v1104, 0.5
      %v1194 = vmul.f32 %v1110, 0.5
      %v1195 = vmul.f32 %v1114, 0.5
      %v1196 = vmul.f32 %v1120, 0.5
      %v1197 = vmul.f32 %v1124, 0.5
      %v1198 = vmul.f32 %v1130, 0.5
      %v1199 = vmul.f32 %v1134, 0.5
      %v1200 = vmul.f32 %v1140, 0.5
      %v1201 = vmul.f32 %v1144, 0.5
      %v1202 = vmul.f32 %v1150, 0.5
      %v1203 = vmul.f32 %v1154, 0.5
      %v1204 = vmul.f32 %v1160, 0.5
      %v1205 = vmul.f32 %v1164, 0.5
      %v1206 = vmul.f32 %v1170, 0.5
      %v1207 = vmul.f32 %v1174, 0.5
      %v1208 = vmul.f32 %v1176, 1.442695
      %v1209 = vpow.pop %v1208
      %v1210 = vmul.f32 %v1177, 1.442695
      %v1211 = vpow.pop %v1210
      %v1212 = vmul.f32 %v1178, 1.442695
      %v1213 = vpow.pop %v1212
      %v1214 = vmul.f32 %v1179, 1.442695
      %v1215 = vpow.pop %v1214
      %v1216 = vmul.f32 %v1180, 1.442695
      %v1217 = vpow.pop %v1216
      %v1218 = vmul.f32 %v1181, 1.442695
      %v1219 = vpow.pop %v1218
      %v1220 = vmul.f32 %v1182, 1.442695
      %v1221 = vpow.pop %v1220
      %v1222 = vmul.f32 %v1183, 1.442695
      %v1223 = vpow.pop %v1222
      %v1224 = vmul.f32 %v1184, 1.442695
      %v1225 = vpow.pop %v1224
      %v1226 = vmul.f32 %v1185, 1.442695
      %v1227 = vpow.pop %v1226
      %v1228 = vmul.f32 %v1186, 1.442695
      %v1229 = vpow.pop %v1228
      %v1230 = vmul.f32 %v1187, 1.442695
      %v1231 = vpow.pop %v1230
      %v1232 = vmul.f32 %v1188, 1.442695
      %v1233 = vpow.pop %v1232
      %v1234 = vmul.f32 %v1189, 1.442695
      %v1235 = vpow.pop %v1234
      %v1236 = vmul.f32 %v1190, 1.442695
      %v1237 = vpow.pop %v1236
      %v1238 = vmul.f32 %v1191, 1.442695
      %v1239 = vpow.pop %v1238
      %v1240 = vmul.f32 %v1192, 1.442695
      %v1241 = vpow.pop %v1240
      %v1242 = vmul.f32 %v1193, 1.442695
      %v1243 = vpow.pop %v1242
      %v1244 = vmul.f32 %v1194, 1.442695
      %v1245 = vpow.pop %v1244
      %v1246 = vmul.f32 %v1195, 1.442695
      %v1247 = vpow.pop %v1246
      %v1248 = vmul.f32 %v1196, 1.442695
      %v1249 = vpow.pop %v1248
      %v1250 = vmul.f32 %v1197, 1.442695
      %v1251 = vpow.pop %v1250
      %v1252 = vmul.f32 %v1198, 1.442695
      %v1253 = vpow.pop %v1252
      %v1254 = vmul.f32 %v1199, 1.442695
      %v1255 = vpow.pop %v1254
      %v1256 = vmul.f32 %v1200, 1.442695
      %v1257 = vpow.pop %v1256
      %v1258 = vmul.f32 %v1201, 1.442695
      %v1259 = vpow.pop %v1258
      %v1260 = vmul.f32 %v1202, 1.442695
      %v1261 = vpow.pop %v1260
      %v1262 = vmul.f32 %v1203, 1.442695
      %v1263 = vpow.pop %v1262
      %v1264 = vmul.f32 %v1204, 1.442695
      %v1265 = vpow.pop %v1264
      %v1266 = vmul.f32 %v1205, 1.442695
      %v1267 = vpow.pop %v1266
      %v1268 = vmul.f32 %v1206, 1.442695
      %v1269 = vpow.pop %v1268
      %v1270 = vmul.f32 %v1207, 1.442695
      %v1271 = vpow.pop %v1270
      %v1272 = vld [vmem:[%s446] sm:$0xff]
      %v1273 = vld [vmem:[%s446 + $0x8] sm:$0xff]
      %v1274 = vld [vmem:[%s446 + $0x10] sm:$0xff]
      %v1275 = vld [vmem:[%s446 + $0x18] sm:$0xff]
      %v1276 = vld [vmem:[%s446 + $0x20] sm:$0xff]
      %v1277 = vld [vmem:[%s446 + $0x28] sm:$0xff]
      %v1278 = vld [vmem:[%s446 + $0x30] sm:$0xff]
      %v1279 = vld [vmem:[%s446 + $0x38] sm:$0xff]
      %v1280 = vld [vmem:[%s446 + $0x40] sm:$0xff]
      %v1281 = vld [vmem:[%s446 + $0x48] sm:$0xff]
      %v1282 = vld [vmem:[%s446 + $0x50] sm:$0xff]
      %v1283 = vld [vmem:[%s446 + $0x58] sm:$0xff]
      %v1284 = vld [vmem:[%s446 + $0x60] sm:$0xff]
      %v1285 = vld [vmem:[%s446 + $0x68] sm:$0xff]
      %v1286 = vld [vmem:[%s446 + $0x70] sm:$0xff]
      %v1287 = vld [vmem:[%s446 + $0x78] sm:$0xff]
      %v1288 = vld [vmem:[%s446 + $0x80] sm:$0xff]
      %v1289 = vld [vmem:[%s446 + $0x88] sm:$0xff]
      %v1290 = vld [vmem:[%s446 + $0x90] sm:$0xff]
      %v1291 = vld [vmem:[%s446 + $0x98] sm:$0xff]
      %v1292 = vld [vmem:[%s446 + $0xa0] sm:$0xff]
      %v1293 = vld [vmem:[%s446 + $0xa8] sm:$0xff]
      %v1294 = vld [vmem:[%s446 + $0xb0] sm:$0xff]
      %v1295 = vld [vmem:[%s446 + $0xb8] sm:$0xff]
      %v1296 = vld [vmem:[%s446 + $0xc0] sm:$0xff]
      %v1297 = vld [vmem:[%s446 + $0xc8] sm:$0xff]
      %v1298 = vld [vmem:[%s446 + $0xd0] sm:$0xff]
      %v1299 = vld [vmem:[%s446 + $0xd8] sm:$0xff]
      %v1300 = vld [vmem:[%s446 + $0xe0] sm:$0xff]
      %v1301 = vld [vmem:[%s446 + $0xe8] sm:$0xff]
      %v1302 = vld [vmem:[%s446 + $0xf0] sm:$0xff]
      %v1303 = vld [vmem:[%s446 + $0xf8] sm:$0xff]
      %v1304 = vmul.f32 %v1272, %v1209
      %v1305 = vmul.f32 %v1273, %v1211
      %v1306 = vmul.f32 %v1274, %v1213
      %v1307 = vmul.f32 %v1275, %v1215
      %v1308 = vmul.f32 %v1276, %v1217
      %v1309 = vmul.f32 %v1277, %v1219
      %v1310 = vmul.f32 %v1278, %v1221
      %v1311 = vmul.f32 %v1279, %v1223
      %v1312 = vmul.f32 %v1280, %v1225
      %v1313 = vmul.f32 %v1281, %v1227
      %v1314 = vmul.f32 %v1282, %v1229
      %v1315 = vmul.f32 %v1283, %v1231
      %v1316 = vmul.f32 %v1284, %v1233
      %v1317 = vmul.f32 %v1285, %v1235
      %v1318 = vmul.f32 %v1286, %v1237
      %v1319 = vmul.f32 %v1287, %v1239
      %v1320 = vmul.f32 %v1288, %v1241
      %v1321 = vmul.f32 %v1289, %v1243
      %v1322 = vmul.f32 %v1290, %v1245
      %v1323 = vmul.f32 %v1291, %v1247
      %v1324 = vmul.f32 %v1292, %v1249
      %v1325 = vmul.f32 %v1293, %v1251
      %v1326 = vmul.f32 %v1294, %v1253
      %v1327 = vmul.f32 %v1295, %v1255
      %v1328 = vmul.f32 %v1296, %v1257
      %v1329 = vmul.f32 %v1297, %v1259
      %v1330 = vmul.f32 %v1298, %v1261
      %v1331 = vmul.f32 %v1299, %v1263
      %v1332 = vmul.f32 %v1300, %v1265
      %v1333 = vmul.f32 %v1301, %v1267
      %v1334 = vmul.f32 %v1302, %v1269
      %v1335 = vmul.f32 %v1303, %v1271
      %v1336 = vadd.f32 %v1018, %v1304
      %v1337 = vadd.f32 %v1022, %v1305
      %v1338 = vadd.f32 %v1028, %v1306
      %v1339 = vadd.f32 %v1032, %v1307
      %v1340 = vadd.f32 %v1038, %v1308
      %v1341 = vadd.f32 %v1042, %v1309
      %v1342 = vadd.f32 %v1048, %v1310
      %v1343 = vadd.f32 %v1052, %v1311
      %v1344 = vadd.f32 %v1058, %v1312
      %v1345 = vadd.f32 %v1062, %v1313
      %v1346 = vadd.f32 %v1068, %v1314
      %v1347 = vadd.f32 %v1072, %v1315
      %v1348 = vadd.f32 %v1078, %v1316
      %v1349 = vadd.f32 %v1082, %v1317
      %v1350 = vadd.f32 %v1088, %v1318
      %v1351 = vadd.f32 %v1092, %v1319
      %v1352 = vadd.f32 %v1098, %v1320
      %v1353 = vadd.f32 %v1102, %v1321
      %v1354 = vadd.f32 %v1108, %v1322
      %v1355 = vadd.f32 %v1112, %v1323
      %v1356 = vadd.f32 %v1118, %v1324
      %v1357 = vadd.f32 %v1122, %v1325
      %v1358 = vadd.f32 %v1128, %v1326
      %v1359 = vadd.f32 %v1132, %v1327
      %v1360 = vadd.f32 %v1138, %v1328
      %v1361 = vadd.f32 %v1142, %v1329
      %v1362 = vadd.f32 %v1148, %v1330
      %v1363 = vadd.f32 %v1152, %v1331
      %v1364 = vadd.f32 %v1158, %v1332
      %v1365 = vadd.f32 %v1162, %v1333
      %v1366 = vadd.f32 %v1168, %v1334
      %v1367 = vadd.f32 %v1172, %v1335
      %v1368 = vpack.c.bf16 %v1337, %v1336
      %v1369 = vpack.c.bf16 %v1339, %v1338
      %v1370 = vpack.c.bf16 %v1341, %v1340
      %v1371 = vpack.c.bf16 %v1343, %v1342
      %v1372 = vpack.c.bf16 %v1345, %v1344
      %v1373 = vpack.c.bf16 %v1347, %v1346
      %v1374 = vpack.c.bf16 %v1349, %v1348
      %v1375 = vpack.c.bf16 %v1351, %v1350
      %v1376 = vpack.c.bf16 %v1353, %v1352
      %v1377 = vpack.c.bf16 %v1355, %v1354
      %v1378 = vpack.c.bf16 %v1357, %v1356
      %v1379 = vpack.c.bf16 %v1359, %v1358
      %v1380 = vpack.c.bf16 %v1361, %v1360
      %v1381 = vpack.c.bf16 %v1363, %v1362
      %v1382 = vpack.c.bf16 %v1365, %v1364
      %v1383 = vpack.c.bf16 %v1367, %v1366
      %v1384 = vld [vmem:[%s6] sm:$0xf]
      %v1385 = vld [vmem:[%s6 + $0x4] sm:$0xf]
      %v1386 = vld [vmem:[%s6 + $0x8] sm:$0xf]
      %v1387 = vld [vmem:[%s6 + $0xc] sm:$0xf]
      %v1388 = vld [vmem:[%s6 + $0x10] sm:$0xf]
      %v1389 = vld [vmem:[%s6 + $0x14] sm:$0xf]
      %v1390 = vld [vmem:[%s6 + $0x18] sm:$0xf]
      %v1391 = vld [vmem:[%s6 + $0x1c] sm:$0xf]
      %v1392 = vld [vmem:[%s6 + $0x20] sm:$0xf]
      %v1393 = vld [vmem:[%s6 + $0x24] sm:$0xf]
      %v1394 = vld [vmem:[%s6 + $0x28] sm:$0xf]
      %v1395 = vld [vmem:[%s6 + $0x2c] sm:$0xf]
      %v1396 = vld [vmem:[%s6 + $0x30] sm:$0xf]
      %v1397 = vld [vmem:[%s6 + $0x34] sm:$0xf]
      %v1398 = vld [vmem:[%s6 + $0x38] sm:$0xf]
      %v1399 = vld [vmem:[%s6 + $0x3c] sm:$0xf]
      %v1400 = vld [vmem:[%s7] sm:$0x1]
      %v1402 = vlaneseq
      %v1403 = vshrl.u32 %v1402, 7
      %v1404 = vsub.s32 0, %v1403
      %v1405 = vrot.slane %v1400, %v1404
      %v1423 = vunpack.c.l.b16 %v1384
      %v1424 = vunpack.c.l.b16 %v1385
      %v1425 = vunpack.c.l.b16 %v1386
      %v1426 = vunpack.c.l.b16 %v1387
      %v1427 = vunpack.c.l.b16 %v1388
      %v1428 = vunpack.c.l.b16 %v1389
      %v1429 = vunpack.c.l.b16 %v1390
      %v1430 = vunpack.c.l.b16 %v1391
      %v1431 = vunpack.c.l.b16 %v1392
      %v1432 = vunpack.c.l.b16 %v1393
      %v1433 = vunpack.c.l.b16 %v1394
      %v1434 = vunpack.c.l.b16 %v1395
      %v1435 = vunpack.c.l.b16 %v1396
      %v1436 = vunpack.c.l.b16 %v1397
      %v1437 = vunpack.c.l.b16 %v1398
      %v1438 = vunpack.c.l.b16 %v1399
      %v1439 = vpack.c.b16 %v1424, %v1423
      %v1440 = vpack.c.b16 %v1426, %v1425
      %v1441 = vpack.c.b16 %v1428, %v1427
      %v1442 = vpack.c.b16 %v1430, %v1429
      %v1443 = vpack.c.b16 %v1432, %v1431
      %v1444 = vpack.c.b16 %v1434, %v1433
      %v1445 = vpack.c.b16 %v1436, %v1435
      %v1446 = vpack.c.b16 %v1438, %v1437
      %1455 = vmatprep.subr.bf16.mxu0 0
      %1456 = vmatpush1.bf16.msra.mxu0 %v1446
      %1457 = vmatprep.subr.bf16.mxu0 0
      %1458 = vmatpush1.bf16.msra.mxu0 %v1445
      %1459 = vmatprep.subr.bf16.mxu0 0
      %1460 = vmatpush1.bf16.msra.mxu0 %v1444
      %1461 = vmatprep.subr.bf16.mxu0 0
      %1462 = vmatpush1.bf16.msra.mxu0 %v1443
      %1463 = vmatprep.subr.bf16.mxu0 0
      %1464 = vmatpush1.bf16.msra.mxu0 %v1442
      %1465 = vmatprep.subr.bf16.mxu0 0
      %1466 = vmatpush1.bf16.msra.mxu0 %v1441
      %1467 = vmatprep.subr.bf16.mxu0 0
      %1468 = vmatpush1.bf16.msra.mxu0 %v1440
      %1469 = vmatprep.subr.bf16.mxu0 0
      %1470 = vmatpush1.bf16.msra.mxu0 %v1439
      %1471 = vmatprep.subr.bf16.mxu0 0
      %1472 = vmatpush2.bf16.msra.mxu0 0
      %1473 = vmatprep.subr.bf16.mxu0 0
      %1474 = vmatpush2.bf16.msra.mxu0 0
      %1475 = vmatprep.subr.bf16.mxu0 0
      %1476 = vmatpush2.bf16.msra.mxu0 0
      %1477 = vmatprep.subr.bf16.mxu0 0
      %1478 = vmatpush2.bf16.msra.mxu0 0
      %1479 = vmatprep.subr.bf16.mxu0 0
      %1480 = vmatpush2.bf16.msra.mxu0 0
      %1481 = vmatprep.subr.bf16.mxu0 0
      %1482 = vmatpush2.bf16.msra.mxu0 0
      %1483 = vmatprep.subr.bf16.mxu0 0
      %1484 = vmatpush2.bf16.msra.mxu0 0
      %1485 = vmatprep.subr.bf16.mxu0 0
      %1486 = vmatpush2.bf16.msra.mxu0 0
      %1487 = vmatprep.mubr.bf16.mxu0 0
      %1488 = vmatmul.mubr.bf16.gmra.mxu0 %v1368
      %v1489 = vpop.f32.mrf.mxu0
      %v1490 = vadd.f32 %v1405, %v1489
      %v1491 = vpop.f32.mrf.mxu0
      %v1492 = vpop.f32.mrf.mxu0
      %v1493 = vadd.f32 %v1405, %v1492
      %v1494 = vpop.f32.mrf.mxu0
      %1495 = vmatprep.mubr.bf16.mxu0 0
      %1496 = vmatmul.mubr.bf16.gmra.mxu0 %v1369
      %v1497 = vpop.f32.mrf.mxu0
      %v1498 = vadd.f32 %v1405, %v1497
      %v1499 = vpop.f32.mrf.mxu0
      %v1500 = vpop.f32.mrf.mxu0
      %v1501 = vadd.f32 %v1405, %v1500
      %v1502 = vpop.f32.mrf.mxu0
      %1503 = vmatprep.mubr.bf16.mxu0 0
      %1504 = vmatmul.mubr.bf16.gmra.mxu0 %v1370
      %v1505 = vpop.f32.mrf.mxu0
      %v1506 = vadd.f32 %v1405, %v1505
      %v1507 = vpop.f32.mrf.mxu0
      %v1508 = vpop.f32.mrf.mxu0
      %v1509 = vadd.f32 %v1405, %v1508
      %v1510 = vpop.f32.mrf.mxu0
      %1511 = vmatprep.mubr.bf16.mxu0 0
      %1512 = vmatmul.mubr.bf16.gmra.mxu0 %v1371
      %v1513 = vpop.f32.mrf.mxu0
      %v1514 = vadd.f32 %v1405, %v1513
      %v1515 = vpop.f32.mrf.mxu0
      %v1516 = vpop.f32.mrf.mxu0
      %v1517 = vadd.f32 %v1405, %v1516
      %v1518 = vpop.f32.mrf.mxu0
      %1519 = vmatprep.mubr.bf16.mxu0 0
      %1520 = vmatmul.mubr.bf16.gmra.mxu0 %v1372
      %v1521 = vpop.f32.mrf.mxu0
      %v1522 = vadd.f32 %v1405, %v1521
      %v1523 = vpop.f32.mrf.mxu0
      %v1524 = vpop.f32.mrf.mxu0
      %v1525 = vadd.f32 %v1405, %v1524
      %v1526 = vpop.f32.mrf.mxu0
      %1527 = vmatprep.mubr.bf16.mxu0 0
      %1528 = vmatmul.mubr.bf16.gmra.mxu0 %v1373
      %v1529 = vpop.f32.mrf.mxu0
      %v1530 = vadd.f32 %v1405, %v1529
      %v1531 = vpop.f32.mrf.mxu0
      %v1532 = vpop.f32.mrf.mxu0
      %v1533 = vadd.f32 %v1405, %v1532
      %v1534 = vpop.f32.mrf.mxu0
      %1535 = vmatprep.mubr.bf16.mxu0 0
      %1536 = vmatmul.mubr.bf16.gmra.mxu0 %v1374
      %v1537 = vpop.f32.mrf.mxu0
      %v1538 = vadd.f32 %v1405, %v1537
      %v1539 = vpop.f32.mrf.mxu0
      %v1540 = vpop.f32.mrf.mxu0
      %v1541 = vadd.f32 %v1405, %v1540
      %v1542 = vpop.f32.mrf.mxu0
      %1543 = vmatprep.mubr.bf16.mxu0 0
      %1544 = vmatmul.mubr.bf16.gmra.mxu0 %v1375
      %v1545 = vpop.f32.mrf.mxu0
      %v1546 = vadd.f32 %v1405, %v1545
      %v1547 = vpop.f32.mrf.mxu0
      %v1548 = vpop.f32.mrf.mxu0
      %v1549 = vadd.f32 %v1405, %v1548
      %v1550 = vpop.f32.mrf.mxu0
      %1551 = vmatprep.mubr.bf16.mxu0 0
      %1552 = vmatmul.mubr.bf16.gmra.mxu0 %v1376
      %v1553 = vpop.f32.mrf.mxu0
      %v1554 = vadd.f32 %v1405, %v1553
      %v1555 = vpop.f32.mrf.mxu0
      %v1556 = vpop.f32.mrf.mxu0
      %v1557 = vadd.f32 %v1405, %v1556
      %v1558 = vpop.f32.mrf.mxu0
      %1559 = vmatprep.mubr.bf16.mxu0 0
      %1560 = vmatmul.mubr.bf16.gmra.mxu0 %v1377
      %v1561 = vpop.f32.mrf.mxu0
      %v1562 = vadd.f32 %v1405, %v1561
      %v1563 = vpop.f32.mrf.mxu0
      %v1564 = vpop.f32.mrf.mxu0
      %v1565 = vadd.f32 %v1405, %v1564
      %v1566 = vpop.f32.mrf.mxu0
      %1567 = vmatprep.mubr.bf16.mxu0 0
      %1568 = vmatmul.mubr.bf16.gmra.mxu0 %v1378
      %v1569 = vpop.f32.mrf.mxu0
      %v1570 = vadd.f32 %v1405, %v1569
      %v1571 = vpop.f32.mrf.mxu0
      %v1572 = vpop.f32.mrf.mxu0
      %v1573 = vadd.f32 %v1405, %v1572
      %v1574 = vpop.f32.mrf.mxu0
      %1575 = vmatprep.mubr.bf16.mxu0 0
      %1576 = vmatmul.mubr.bf16.gmra.mxu0 %v1379
      %v1577 = vpop.f32.mrf.mxu0
      %v1578 = vadd.f32 %v1405, %v1577
      %v1579 = vpop.f32.mrf.mxu0
      %v1580 = vpop.f32.mrf.mxu0
      %v1581 = vadd.f32 %v1405, %v1580
      %v1582 = vpop.f32.mrf.mxu0
      %1583 = vmatprep.mubr.bf16.mxu0 0
      %1584 = vmatmul.mubr.bf16.gmra.mxu0 %v1380
      %v1585 = vpop.f32.mrf.mxu0
      %v1586 = vadd.f32 %v1405, %v1585
      %v1587 = vpop.f32.mrf.mxu0
      %v1588 = vpop.f32.mrf.mxu0
      %v1589 = vadd.f32 %v1405, %v1588
      %v1590 = vpop.f32.mrf.mxu0
      %1591 = vmatprep.mubr.bf16.mxu0 0
      %1592 = vmatmul.mubr.bf16.gmra.mxu0 %v1381
      %v1593 = vpop.f32.mrf.mxu0
      %v1594 = vadd.f32 %v1405, %v1593
      %v1595 = vpop.f32.mrf.mxu0
      %v1596 = vpop.f32.mrf.mxu0
      %v1597 = vadd.f32 %v1405, %v1596
      %v1598 = vpop.f32.mrf.mxu0
      %1599 = vmatprep.mubr.bf16.mxu0 0
      %1600 = vmatmul.mubr.bf16.gmra.mxu0 %v1382
      %v1601 = vpop.f32.mrf.mxu0
      %v1602 = vadd.f32 %v1405, %v1601
      %v1603 = vpop.f32.mrf.mxu0
      %v1604 = vpop.f32.mrf.mxu0
      %v1605 = vadd.f32 %v1405, %v1604
      %v1606 = vpop.f32.mrf.mxu0
      %1607 = vmatprep.mubr.bf16.mxu0 0
      %1608 = vmatmul.mubr.bf16.gmra.mxu0 %v1383
      %v1609 = vpop.f32.mrf.mxu0
      %v1610 = vadd.f32 %v1405, %v1609
      %v1611 = vpop.f32.mrf.mxu0
      %v1612 = vpop.f32.mrf.mxu0
      %v1613 = vadd.f32 %v1405, %v1612
      %v1614 = vpop.f32.mrf.mxu0
      %1615 = vdwg.mxu0
      %v1616 = vmax.f32 %v1490, 0.0
      %v1617 = vmax.f32 %v1493, 0.0
      %v1618 = vmax.f32 %v1498, 0.0
      %v1619 = vmax.f32 %v1501, 0.0
      %v1620 = vmax.f32 %v1506, 0.0
      %v1621 = vmax.f32 %v1509, 0.0
      %v1622 = vmax.f32 %v1514, 0.0
      %v1623 = vmax.f32 %v1517, 0.0
      %v1624 = vmax.f32 %v1522, 0.0
      %v1625 = vmax.f32 %v1525, 0.0
      %v1626 = vmax.f32 %v1530, 0.0
      %v1627 = vmax.f32 %v1533, 0.0
      %v1628 = vmax.f32 %v1538, 0.0
      %v1629 = vmax.f32 %v1541, 0.0
      %v1630 = vmax.f32 %v1546, 0.0
      %v1631 = vmax.f32 %v1549, 0.0
      %v1632 = vmax.f32 %v1554, 0.0
      %v1633 = vmax.f32 %v1557, 0.0
      %v1634 = vmax.f32 %v1562, 0.0
      %v1635 = vmax.f32 %v1565, 0.0
      %v1636 = vmax.f32 %v1570, 0.0
      %v1637 = vmax.f32 %v1573, 0.0
      %v1638 = vmax.f32 %v1578, 0.0
      %v1639 = vmax.f32 %v1581, 0.0
      %v1640 = vmax.f32 %v1586, 0.0
      %v1641 = vmax.f32 %v1589, 0.0
      %v1642 = vmax.f32 %v1594, 0.0
      %v1643 = vmax.f32 %v1597, 0.0
      %v1644 = vmax.f32 %v1602, 0.0
      %v1645 = vmax.f32 %v1605, 0.0
      %v1646 = vmax.f32 %v1610, 0.0
      %v1647 = vmax.f32 %v1613, 0.0
      %v1648 = vpack.c.bf16 %v1617, %v1616
      %v1649 = vpack.c.bf16 %v1619, %v1618
      %v1650 = vpack.c.bf16 %v1621, %v1620
      %v1651 = vpack.c.bf16 %v1623, %v1622
      %v1652 = vpack.c.bf16 %v1625, %v1624
      %v1653 = vpack.c.bf16 %v1627, %v1626
      %v1654 = vpack.c.bf16 %v1629, %v1628
      %v1655 = vpack.c.bf16 %v1631, %v1630
      %v1656 = vpack.c.bf16 %v1633, %v1632
      %v1657 = vpack.c.bf16 %v1635, %v1634
      %v1658 = vpack.c.bf16 %v1637, %v1636
      %v1659 = vpack.c.bf16 %v1639, %v1638
      %v1660 = vpack.c.bf16 %v1641, %v1640
      %v1661 = vpack.c.bf16 %v1643, %v1642
      %v1662 = vpack.c.bf16 %v1645, %v1644
      %v1663 = vpack.c.bf16 %v1647, %v1646
      %v1664 = vld [vmem:[%s8] sm:$0xf]
      %v1665 = vld [vmem:[%s8 + $0x4] sm:$0xf]
      %v1666 = vld [vmem:[%s8 + $0x8] sm:$0xf]
      %v1667 = vld [vmem:[%s8 + $0xc] sm:$0xf]
      %v1668 = vld [vmem:[%s8 + $0x10] sm:$0xf]
      %v1669 = vld [vmem:[%s8 + $0x14] sm:$0xf]
      %v1670 = vld [vmem:[%s8 + $0x18] sm:$0xf]
      %v1671 = vld [vmem:[%s8 + $0x1c] sm:$0xf]
      %v1672 = vld [vmem:[%s8 + $0x20] sm:$0xf]
      %v1673 = vld [vmem:[%s8 + $0x24] sm:$0xf]
      %v1674 = vld [vmem:[%s8 + $0x28] sm:$0xf]
      %v1675 = vld [vmem:[%s8 + $0x2c] sm:$0xf]
      %v1676 = vld [vmem:[%s8 + $0x30] sm:$0xf]
      %v1677 = vld [vmem:[%s8 + $0x34] sm:$0xf]
      %v1678 = vld [vmem:[%s8 + $0x38] sm:$0xf]
      %v1679 = vld [vmem:[%s8 + $0x3c] sm:$0xf]
      %v1680 = vld [vmem:[%s9] sm:$0x1]
      %v1682 = vlaneseq
      %v1683 = vshrl.u32 %v1682, 7
      %v1684 = vsub.s32 0, %v1683
      %v1685 = vrot.slane %v1680, %v1684
      %v1703 = vunpack.c.l.b16 %v1664
      %v1704 = vunpack.c.l.b16 %v1665
      %v1705 = vunpack.c.l.b16 %v1666
      %v1706 = vunpack.c.l.b16 %v1667
      %v1707 = vunpack.c.l.b16 %v1668
      %v1708 = vunpack.c.l.b16 %v1669
      %v1709 = vunpack.c.l.b16 %v1670
      %v1710 = vunpack.c.l.b16 %v1671
      %v1711 = vunpack.c.l.b16 %v1672
      %v1712 = vunpack.c.l.b16 %v1673
      %v1713 = vunpack.c.l.b16 %v1674
      %v1714 = vunpack.c.l.b16 %v1675
      %v1715 = vunpack.c.l.b16 %v1676
      %v1716 = vunpack.c.l.b16 %v1677
      %v1717 = vunpack.c.l.b16 %v1678
      %v1718 = vunpack.c.l.b16 %v1679
      %v1719 = vpack.c.b16 %v1704, %v1703
      %v1720 = vpack.c.b16 %v1706, %v1705
      %v1721 = vpack.c.b16 %v1708, %v1707
      %v1722 = vpack.c.b16 %v1710, %v1709
      %v1723 = vpack.c.b16 %v1712, %v1711
      %v1724 = vpack.c.b16 %v1714, %v1713
      %v1725 = vpack.c.b16 %v1716, %v1715
      %v1726 = vpack.c.b16 %v1718, %v1717
      %1735 = vmatprep.subr.bf16.mxu0 0
      %1736 = vmatpush1.bf16.msra.mxu0 %v1726
      %1737 = vmatprep.subr.bf16.mxu0 0
      %1738 = vmatpush1.bf16.msra.mxu0 %v1725
      %1739 = vmatprep.subr.bf16.mxu0 0
      %1740 = vmatpush1.bf16.msra.mxu0 %v1724
      %1741 = vmatprep.subr.bf16.mxu0 0
      %1742 = vmatpush1.bf16.msra.mxu0 %v1723
      %1743 = vmatprep.subr.bf16.mxu0 0
      %1744 = vmatpush1.bf16.msra.mxu0 %v1722
      %1745 = vmatprep.subr.bf16.mxu0 0
      %1746 = vmatpush1.bf16.msra.mxu0 %v1721
      %1747 = vmatprep.subr.bf16.mxu0 0
      %1748 = vmatpush1.bf16.msra.mxu0 %v1720
      %1749 = vmatprep.subr.bf16.mxu0 0
      %1750 = vmatpush1.bf16.msra.mxu0 %v1719
      %1751 = vmatprep.subr.bf16.mxu0 0
      %1752 = vmatpush2.bf16.msra.mxu0 0
      %1753 = vmatprep.subr.bf16.mxu0 0
      %1754 = vmatpush2.bf16.msra.mxu0 0
      %1755 = vmatprep.subr.bf16.mxu0 0
      %1756 = vmatpush2.bf16.msra.mxu0 0
      %1757 = vmatprep.subr.bf16.mxu0 0
      %1758 = vmatpush2.bf16.msra.mxu0 0
      %1759 = vmatprep.subr.bf16.mxu0 0
      %1760 = vmatpush2.bf16.msra.mxu0 0
      %1761 = vmatprep.subr.bf16.mxu0 0
      %1762 = vmatpush2.bf16.msra.mxu0 0
      %1763 = vmatprep.subr.bf16.mxu0 0
      %1764 = vmatpush2.bf16.msra.mxu0 0
      %1765 = vmatprep.subr.bf16.mxu0 0
      %1766 = vmatpush2.bf16.msra.mxu0 0
      %1767 = vmatprep.mubr.bf16.mxu0 0
      %1768 = vmatmul.mubr.bf16.gmra.mxu0 %v1648
      %v1769 = vpop.f32.mrf.mxu0
      %v1770 = vadd.f32 %v1685, %v1769
      %v1771 = vpop.f32.mrf.mxu0
      %v1772 = vpop.f32.mrf.mxu0
      %v1773 = vadd.f32 %v1685, %v1772
      %v1774 = vpop.f32.mrf.mxu0
      %1775 = vmatprep.mubr.bf16.mxu0 0
      %1776 = vmatmul.mubr.bf16.gmra.mxu0 %v1649
      %v1777 = vpop.f32.mrf.mxu0
      %v1778 = vadd.f32 %v1685, %v1777
      %v1779 = vpop.f32.mrf.mxu0
      %v1780 = vpop.f32.mrf.mxu0
      %v1781 = vadd.f32 %v1685, %v1780
      %v1782 = vpop.f32.mrf.mxu0
      %1783 = vmatprep.mubr.bf16.mxu0 0
      %1784 = vmatmul.mubr.bf16.gmra.mxu0 %v1650
      %v1785 = vpop.f32.mrf.mxu0
      %v1786 = vadd.f32 %v1685, %v1785
      %v1787 = vpop.f32.mrf.mxu0
      %v1788 = vpop.f32.mrf.mxu0
      %v1789 = vadd.f32 %v1685, %v1788
      %v1790 = vpop.f32.mrf.mxu0
      %1791 = vmatprep.mubr.bf16.mxu0 0
      %1792 = vmatmul.mubr.bf16.gmra.mxu0 %v1651
      %v1793 = vpop.f32.mrf.mxu0
      %v1794 = vadd.f32 %v1685, %v1793
      %v1795 = vpop.f32.mrf.mxu0
      %v1796 = vpop.f32.mrf.mxu0
      %v1797 = vadd.f32 %v1685, %v1796
      %v1798 = vpop.f32.mrf.mxu0
      %1799 = vmatprep.mubr.bf16.mxu0 0
      %1800 = vmatmul.mubr.bf16.gmra.mxu0 %v1652
      %v1801 = vpop.f32.mrf.mxu0
      %v1802 = vadd.f32 %v1685, %v1801
      %v1803 = vpop.f32.mrf.mxu0
      %v1804 = vpop.f32.mrf.mxu0
      %v1805 = vadd.f32 %v1685, %v1804
      %v1806 = vpop.f32.mrf.mxu0
      %1807 = vmatprep.mubr.bf16.mxu0 0
      %1808 = vmatmul.mubr.bf16.gmra.mxu0 %v1653
      %v1809 = vpop.f32.mrf.mxu0
      %v1810 = vadd.f32 %v1685, %v1809
      %v1811 = vpop.f32.mrf.mxu0
      %v1812 = vpop.f32.mrf.mxu0
      %v1813 = vadd.f32 %v1685, %v1812
      %v1814 = vpop.f32.mrf.mxu0
      %1815 = vmatprep.mubr.bf16.mxu0 0
      %1816 = vmatmul.mubr.bf16.gmra.mxu0 %v1654
      %v1817 = vpop.f32.mrf.mxu0
      %v1818 = vadd.f32 %v1685, %v1817
      %v1819 = vpop.f32.mrf.mxu0
      %v1820 = vpop.f32.mrf.mxu0
      %v1821 = vadd.f32 %v1685, %v1820
      %v1822 = vpop.f32.mrf.mxu0
      %1823 = vmatprep.mubr.bf16.mxu0 0
      %1824 = vmatmul.mubr.bf16.gmra.mxu0 %v1655
      %v1825 = vpop.f32.mrf.mxu0
      %v1826 = vadd.f32 %v1685, %v1825
      %v1827 = vpop.f32.mrf.mxu0
      %v1828 = vpop.f32.mrf.mxu0
      %v1829 = vadd.f32 %v1685, %v1828
      %v1830 = vpop.f32.mrf.mxu0
      %1831 = vmatprep.mubr.bf16.mxu0 0
      %1832 = vmatmul.mubr.bf16.gmra.mxu0 %v1656
      %v1833 = vpop.f32.mrf.mxu0
      %v1834 = vadd.f32 %v1685, %v1833
      %v1835 = vpop.f32.mrf.mxu0
      %v1836 = vpop.f32.mrf.mxu0
      %v1837 = vadd.f32 %v1685, %v1836
      %v1838 = vpop.f32.mrf.mxu0
      %1839 = vmatprep.mubr.bf16.mxu0 0
      %1840 = vmatmul.mubr.bf16.gmra.mxu0 %v1657
      %v1841 = vpop.f32.mrf.mxu0
      %v1842 = vadd.f32 %v1685, %v1841
      %v1843 = vpop.f32.mrf.mxu0
      %v1844 = vpop.f32.mrf.mxu0
      %v1845 = vadd.f32 %v1685, %v1844
      %v1846 = vpop.f32.mrf.mxu0
      %1847 = vmatprep.mubr.bf16.mxu0 0
      %1848 = vmatmul.mubr.bf16.gmra.mxu0 %v1658
      %v1849 = vpop.f32.mrf.mxu0
      %v1850 = vadd.f32 %v1685, %v1849
      %v1851 = vpop.f32.mrf.mxu0
      %v1852 = vpop.f32.mrf.mxu0
      %v1853 = vadd.f32 %v1685, %v1852
      %v1854 = vpop.f32.mrf.mxu0
      %1855 = vmatprep.mubr.bf16.mxu0 0
      %1856 = vmatmul.mubr.bf16.gmra.mxu0 %v1659
      %v1857 = vpop.f32.mrf.mxu0
      %v1858 = vadd.f32 %v1685, %v1857
      %v1859 = vpop.f32.mrf.mxu0
      %v1860 = vpop.f32.mrf.mxu0
      %v1861 = vadd.f32 %v1685, %v1860
      %v1862 = vpop.f32.mrf.mxu0
      %1863 = vmatprep.mubr.bf16.mxu0 0
      %1864 = vmatmul.mubr.bf16.gmra.mxu0 %v1660
      %v1865 = vpop.f32.mrf.mxu0
      %v1866 = vadd.f32 %v1685, %v1865
      %v1867 = vpop.f32.mrf.mxu0
      %v1868 = vpop.f32.mrf.mxu0
      %v1869 = vadd.f32 %v1685, %v1868
      %v1870 = vpop.f32.mrf.mxu0
      %1871 = vmatprep.mubr.bf16.mxu0 0
      %1872 = vmatmul.mubr.bf16.gmra.mxu0 %v1661
      %v1873 = vpop.f32.mrf.mxu0
      %v1874 = vadd.f32 %v1685, %v1873
      %v1875 = vpop.f32.mrf.mxu0
      %v1876 = vpop.f32.mrf.mxu0
      %v1877 = vadd.f32 %v1685, %v1876
      %v1878 = vpop.f32.mrf.mxu0
      %1879 = vmatprep.mubr.bf16.mxu0 0
      %1880 = vmatmul.mubr.bf16.gmra.mxu0 %v1662
      %v1881 = vpop.f32.mrf.mxu0
      %v1882 = vadd.f32 %v1685, %v1881
      %v1883 = vpop.f32.mrf.mxu0
      %v1884 = vpop.f32.mrf.mxu0
      %v1885 = vadd.f32 %v1685, %v1884
      %v1886 = vpop.f32.mrf.mxu0
      %1887 = vmatprep.mubr.bf16.mxu0 0
      %1888 = vmatmul.mubr.bf16.gmra.mxu0 %v1663
      %v1889 = vpop.f32.mrf.mxu0
      %v1890 = vadd.f32 %v1685, %v1889
      %v1891 = vpop.f32.mrf.mxu0
      %v1892 = vpop.f32.mrf.mxu0
      %v1893 = vadd.f32 %v1685, %v1892
      %v1894 = vpop.f32.mrf.mxu0
      %1895 = vdwg.mxu0
      %v1896 = vpack.c.bf16 %v1773, %v1770
      %v1897 = vpack.c.bf16 %v1781, %v1778
      %v1898 = vpack.c.bf16 %v1789, %v1786
      %v1899 = vpack.c.bf16 %v1797, %v1794
      %v1900 = vpack.c.bf16 %v1805, %v1802
      %v1901 = vpack.c.bf16 %v1813, %v1810
      %v1902 = vpack.c.bf16 %v1821, %v1818
      %v1903 = vpack.c.bf16 %v1829, %v1826
      %v1904 = vpack.c.bf16 %v1837, %v1834
      %v1905 = vpack.c.bf16 %v1845, %v1842
      %v1906 = vpack.c.bf16 %v1853, %v1850
      %v1907 = vpack.c.bf16 %v1861, %v1858
      %v1908 = vpack.c.bf16 %v1869, %v1866
      %v1909 = vpack.c.bf16 %v1877, %v1874
      %v1910 = vpack.c.bf16 %v1885, %v1882
      %v1911 = vpack.c.bf16 %v1893, %v1890
      %v1928 = vunpack.c.l.b16 %v1896
      %v1929 = vunpack.c.h.b16 %v1896
      %v1930 = vunpack.c.l.b16 %v1897
      %v1931 = vunpack.c.h.b16 %v1897
      %v1932 = vunpack.c.l.b16 %v1898
      %v1933 = vunpack.c.h.b16 %v1898
      %v1934 = vunpack.c.l.b16 %v1899
      %v1935 = vunpack.c.h.b16 %v1899
      %v1936 = vunpack.c.l.b16 %v1900
      %v1937 = vunpack.c.h.b16 %v1900
      %v1938 = vunpack.c.l.b16 %v1901
      %v1939 = vunpack.c.h.b16 %v1901
      %v1940 = vunpack.c.l.b16 %v1902
      %v1941 = vunpack.c.h.b16 %v1902
      %v1942 = vunpack.c.l.b16 %v1903
      %v1943 = vunpack.c.h.b16 %v1903
      %v1944 = vunpack.c.l.b16 %v1904
      %v1945 = vunpack.c.h.b16 %v1904
      %v1946 = vunpack.c.l.b16 %v1905
      %v1947 = vunpack.c.h.b16 %v1905
      %v1948 = vunpack.c.l.b16 %v1906
      %v1949 = vunpack.c.h.b16 %v1906
      %v1950 = vunpack.c.l.b16 %v1907
      %v1951 = vunpack.c.h.b16 %v1907
      %v1952 = vunpack.c.l.b16 %v1908
      %v1953 = vunpack.c.h.b16 %v1908
      %v1954 = vunpack.c.l.b16 %v1909
      %v1955 = vunpack.c.h.b16 %v1909
      %v1956 = vunpack.c.l.b16 %v1910
      %v1957 = vunpack.c.h.b16 %v1910
      %v1958 = vunpack.c.l.b16 %v1911
      %v1959 = vunpack.c.h.b16 %v1911
      %v1960 = vpack.c.b16 %v1928, %v1928
      %v1961 = vpack.c.b16 %v1929, %v1929
      %v1962 = vpack.c.b16 %v1930, %v1930
      %v1963 = vpack.c.b16 %v1931, %v1931
      %v1964 = vpack.c.b16 %v1932, %v1932
      %v1965 = vpack.c.b16 %v1933, %v1933
      %v1966 = vpack.c.b16 %v1934, %v1934
      %v1967 = vpack.c.b16 %v1935, %v1935
      %v1968 = vpack.c.b16 %v1936, %v1936
      %v1969 = vpack.c.b16 %v1937, %v1937
      %v1970 = vpack.c.b16 %v1938, %v1938
      %v1971 = vpack.c.b16 %v1939, %v1939
      %v1972 = vpack.c.b16 %v1940, %v1940
      %v1973 = vpack.c.b16 %v1941, %v1941
      %v1974 = vpack.c.b16 %v1942, %v1942
      %v1975 = vpack.c.b16 %v1943, %v1943
      %v1976 = vpack.c.b16 %v1944, %v1944
      %v1977 = vpack.c.b16 %v1945, %v1945
      %v1978 = vpack.c.b16 %v1946, %v1946
      %v1979 = vpack.c.b16 %v1947, %v1947
      %v1980 = vpack.c.b16 %v1948, %v1948
      %v1981 = vpack.c.b16 %v1949, %v1949
      %v1982 = vpack.c.b16 %v1950, %v1950
      %v1983 = vpack.c.b16 %v1951, %v1951
      %v1984 = vpack.c.b16 %v1952, %v1952
      %v1985 = vpack.c.b16 %v1953, %v1953
      %v1986 = vpack.c.b16 %v1954, %v1954
      %v1987 = vpack.c.b16 %v1955, %v1955
      %v1988 = vpack.c.b16 %v1956, %v1956
      %v1989 = vpack.c.b16 %v1957, %v1957
      %v1990 = vpack.c.b16 %v1958, %v1958
      %v1991 = vpack.c.b16 %v1959, %v1959
      %2024 = vst [vmem:[%s452] sm:$0xf] %v1960
      %2025 = vst [vmem:[%s452 + $0x4] sm:$0xf] %v1961
      %2026 = vst [vmem:[%s452 + $0x8] sm:$0xf] %v1962
      %2027 = vst [vmem:[%s452 + $0xc] sm:$0xf] %v1963
      %2028 = vst [vmem:[%s452 + $0x10] sm:$0xf] %v1964
      %2029 = vst [vmem:[%s452 + $0x14] sm:$0xf] %v1965
      %2030 = vst [vmem:[%s452 + $0x18] sm:$0xf] %v1966
      %2031 = vst [vmem:[%s452 + $0x1c] sm:$0xf] %v1967
      %2032 = vst [vmem:[%s452 + $0x20] sm:$0xf] %v1968
      %2033 = vst [vmem:[%s452 + $0x24] sm:$0xf] %v1969
      %2034 = vst [vmem:[%s452 + $0x28] sm:$0xf] %v1970
      %2035 = vst [vmem:[%s452 + $0x2c] sm:$0xf] %v1971
      %2036 = vst [vmem:[%s452 + $0x30] sm:$0xf] %v1972
      %2037 = vst [vmem:[%s452 + $0x34] sm:$0xf] %v1973
      %2038 = vst [vmem:[%s452 + $0x38] sm:$0xf] %v1974
      %2039 = vst [vmem:[%s452 + $0x3c] sm:$0xf] %v1975
      %2040 = vst [vmem:[%s452 + $0x40] sm:$0xf] %v1976
      %2041 = vst [vmem:[%s452 + $0x44] sm:$0xf] %v1977
      %2042 = vst [vmem:[%s452 + $0x48] sm:$0xf] %v1978
      %2043 = vst [vmem:[%s452 + $0x4c] sm:$0xf] %v1979
      %2044 = vst [vmem:[%s452 + $0x50] sm:$0xf] %v1980
      %2045 = vst [vmem:[%s452 + $0x54] sm:$0xf] %v1981
      %2046 = vst [vmem:[%s452 + $0x58] sm:$0xf] %v1982
      %2047 = vst [vmem:[%s452 + $0x5c] sm:$0xf] %v1983
      %2048 = vst [vmem:[%s452 + $0x60] sm:$0xf] %v1984
      %2049 = vst [vmem:[%s452 + $0x64] sm:$0xf] %v1985
      %2050 = vst [vmem:[%s452 + $0x68] sm:$0xf] %v1986
      %2051 = vst [vmem:[%s452 + $0x6c] sm:$0xf] %v1987
      %2052 = vst [vmem:[%s452 + $0x70] sm:$0xf] %v1988
      %2053 = vst [vmem:[%s452 + $0x74] sm:$0xf] %v1989
      %2054 = vst [vmem:[%s452 + $0x78] sm:$0xf] %v1990
      %2055 = vst [vmem:[%s452 + $0x7c] sm:$0xf] %v1991
      %2056 = vst [vmem:[%s458] sm:$0xff] %v1018
      %2057 = vst [vmem:[%s458 + $0x8] sm:$0xff] %v1022
      %2058 = vst [vmem:[%s458 + $0x10] sm:$0xff] %v1028
      %2059 = vst [vmem:[%s458 + $0x18] sm:$0xff] %v1032
      %2060 = vst [vmem:[%s458 + $0x20] sm:$0xff] %v1038
      %2061 = vst [vmem:[%s458 + $0x28] sm:$0xff] %v1042
      %2062 = vst [vmem:[%s458 + $0x30] sm:$0xff] %v1048
      %2063 = vst [vmem:[%s458 + $0x38] sm:$0xff] %v1052
      %2064 = vst [vmem:[%s458 + $0x40] sm:$0xff] %v1058
      %2065 = vst [vmem:[%s458 + $0x48] sm:$0xff] %v1062
      %2066 = vst [vmem:[%s458 + $0x50] sm:$0xff] %v1068
      %2067 = vst [vmem:[%s458 + $0x58] sm:$0xff] %v1072
      %2068 = vst [vmem:[%s458 + $0x60] sm:$0xff] %v1078
      %2069 = vst [vmem:[%s458 + $0x68] sm:$0xff] %v1082
      %2070 = vst [vmem:[%s458 + $0x70] sm:$0xff] %v1088
      %2071 = vst [vmem:[%s458 + $0x78] sm:$0xff] %v1092
      %2072 = vst [vmem:[%s458 + $0x80] sm:$0xff] %v1098
      %2073 = vst [vmem:[%s458 + $0x88] sm:$0xff] %v1102
      %2074 = vst [vmem:[%s458 + $0x90] sm:$0xff] %v1108
      %2075 = vst [vmem:[%s458 + $0x98] sm:$0xff] %v1112
      %2076 = vst [vmem:[%s458 + $0xa0] sm:$0xff] %v1118
      %2077 = vst [vmem:[%s458 + $0xa8] sm:$0xff] %v1122
      %2078 = vst [vmem:[%s458 + $0xb0] sm:$0xff] %v1128
      %2079 = vst [vmem:[%s458 + $0xb8] sm:$0xff] %v1132
      %2080 = vst [vmem:[%s458 + $0xc0] sm:$0xff] %v1138
      %2081 = vst [vmem:[%s458 + $0xc8] sm:$0xff] %v1142
      %2082 = vst [vmem:[%s458 + $0xd0] sm:$0xff] %v1148
      %2083 = vst [vmem:[%s458 + $0xd8] sm:$0xff] %v1152
      %2084 = vst [vmem:[%s458 + $0xe0] sm:$0xff] %v1158
      %2085 = vst [vmem:[%s458 + $0xe8] sm:$0xff] %v1162
      %2086 = vst [vmem:[%s458 + $0xf0] sm:$0xff] %v1168
      %2087 = vst [vmem:[%s458 + $0xf8] sm:$0xff] %v1172
      %2088 = vst [vmem:[%s464] sm:$0xff] %v1020
      %2089 = vst [vmem:[%s464 + $0x8] sm:$0xff] %v1024
      %2090 = vst [vmem:[%s464 + $0x10] sm:$0xff] %v1030
      %2091 = vst [vmem:[%s464 + $0x18] sm:$0xff] %v1034
      %2092 = vst [vmem:[%s464 + $0x20] sm:$0xff] %v1040
      %2093 = vst [vmem:[%s464 + $0x28] sm:$0xff] %v1044
      %2094 = vst [vmem:[%s464 + $0x30] sm:$0xff] %v1050
      %2095 = vst [vmem:[%s464 + $0x38] sm:$0xff] %v1054
      %2096 = vst [vmem:[%s464 + $0x40] sm:$0xff] %v1060
      %2097 = vst [vmem:[%s464 + $0x48] sm:$0xff] %v1064
      %2098 = vst [vmem:[%s464 + $0x50] sm:$0xff] %v1070
      %2099 = vst [vmem:[%s464 + $0x58] sm:$0xff] %v1074
      %2100 = vst [vmem:[%s464 + $0x60] sm:$0xff] %v1080
      %2101 = vst [vmem:[%s464 + $0x68] sm:$0xff] %v1084
      %2102 = vst [vmem:[%s464 + $0x70] sm:$0xff] %v1090
      %2103 = vst [vmem:[%s464 + $0x78] sm:$0xff] %v1094
      %2104 = vst [vmem:[%s464 + $0x80] sm:$0xff] %v1100
      %2105 = vst [vmem:[%s464 + $0x88] sm:$0xff] %v1104
      %2106 = vst [vmem:[%s464 + $0x90] sm:$0xff] %v1110
      %2107 = vst [vmem:[%s464 + $0x98] sm:$0xff] %v1114
      %2108 = vst [vmem:[%s464 + $0xa0] sm:$0xff] %v1120
      %2109 = vst [vmem:[%s464 + $0xa8] sm:$0xff] %v1124
      %2110 = vst [vmem:[%s464 + $0xb0] sm:$0xff] %v1130
      %2111 = vst [vmem:[%s464 + $0xb8] sm:$0xff] %v1134
      %2112 = vst [vmem:[%s464 + $0xc0] sm:$0xff] %v1140
      %2113 = vst [vmem:[%s464 + $0xc8] sm:$0xff] %v1144
      %2114 = vst [vmem:[%s464 + $0xd0] sm:$0xff] %v1150
      %2115 = vst [vmem:[%s464 + $0xd8] sm:$0xff] %v1154
      %2116 = vst [vmem:[%s464 + $0xe0] sm:$0xff] %v1160
      %2117 = vst [vmem:[%s464 + $0xe8] sm:$0xff] %v1164
      %2118 = vst [vmem:[%s464 + $0xf0] sm:$0xff] %v1170
      %2119 = vst [vmem:[%s464 + $0xf8] sm:$0xff] %v1174
      %s2120 = smul.u32 32, %s24
      %p2121 = scmp.lt.s32.totalorder %s2120, 127
      %s2122 = scalar_select %p2121, %s2120, 127
      %s2123 = smul.addr %s2122, 4
      %s2124 = scalar_lea.vmem %s10, %s2123
      %s2125 = smul.u32 32, %s24
      %p2126 = scmp.lt.s32.totalorder %s2125, 127
      %s2127 = scalar_select %p2126, %s2125, 127
      %s2128 = smul.addr %s2127, 8
      %s2129 = scalar_lea.vmem %s11, %s2128
      %s2130 = smul.u32 32, %s24
      %p2131 = scmp.lt.s32.totalorder %s2130, 127
      %s2132 = scalar_select %p2131, %s2130, 127
      %s2133 = smul.addr %s2132, 8
      %s2134 = scalar_lea.vmem %s12, %s2133
      // Predicated region
      $region61: #{vae_forward.1} parent=59 // pred_check
        %p2135 = pneg %p262
      $region62: #{vae_forward.1} parent=59 // pred_check_branch
        %2137 = sbr.rel (%p2135) target = $region64
      $region63: #{vae_forward.1} parent=59 // pred_region
        %s2138 = smul.u32 32, %s24
      $region64: #{vae_forward.1} parent=59 // pred_fallthru
        _
      // Predicated region
      $region65: #{vae_forward.1} parent=59 // pred_check
        %p2139 = pneg %p288
      $region66: #{vae_forward.1} parent=59 // pred_check_branch
        %2141 = sbr.rel (%p2139) target = $region68
      $region67: #{vae_forward.1} parent=59 // pred_region
        %s2142 = smul.u32 32, %s24
      $region68: #{vae_forward.1} parent=59 // pred_fallthru
        _
      // Predicated region
      $region69: #{vae_forward.1} parent=59 // pred_check
        %p2143 = pneg %p314
      $region70: #{vae_forward.1} parent=59 // pred_check_branch
        %2145 = sbr.rel (%p2143) target = $region72
      $region71: #{vae_forward.1} parent=59 // pred_region
        %s2146 = smul.u32 32, %s24
      $region72: #{vae_forward.1} parent=59 // pred_fallthru
        _
    $region60: #{vae_forward.1} parent=5 // pred_fallthru
      _
    %p2147 = scmp.le.s32.totalorder 2, %s19
    // Predicated region
    $region73: #{vae_forward.1} parent=5 // pred_check
      %p2148 = pneg %p2147
    $region74: #{vae_forward.1} parent=5 // pred_check_branch
      %2150 = sbr.rel (%p2148) target = $region76
    $region75: #{vae_forward.1} parent=5 // pred_region
      %s2151 = ssub.s32 %s19, 2
      // Predicated region
      $region77: #{vae_forward.1} parent=75 // pred_check
        %p2152 = pneg %p268
      $region78: #{vae_forward.1} parent=75 // pred_check_branch
        %2154 = sbr.rel (%p2152) target = $region80
      $region79: #{vae_forward.1} parent=75 // pred_region
        %s2155 = smul.u32 32, %s25
        %p2156 = scmp.lt.s32.totalorder %s2155, 127
        %s2157 = scalar_select %p2156, %s2155, 127
        %s2158 = smul.addr %s2157, 4
        %s2159 = scalar_lea.vmem %s10, %s2158
      $region80: #{vae_forward.1} parent=75 // pred_fallthru
        _
      // Predicated region
      $region81: #{vae_forward.1} parent=75 // pred_check
        %p2160 = pneg %p294
      $region82: #{vae_forward.1} parent=75 // pred_check_branch
        %2162 = sbr.rel (%p2160) target = $region84
      $region83: #{vae_forward.1} parent=75 // pred_region
        %s2163 = smul.u32 32, %s25
        %p2164 = scmp.lt.s32.totalorder %s2163, 127
        %s2165 = scalar_select %p2164, %s2163, 127
        %s2166 = smul.addr %s2165, 8
        %s2167 = scalar_lea.vmem %s11, %s2166
      $region84: #{vae_forward.1} parent=75 // pred_fallthru
        _
      // Predicated region
      $region85: #{vae_forward.1} parent=75 // pred_check
        %p2168 = pneg %p320
      $region86: #{vae_forward.1} parent=75 // pred_check_branch
        %2170 = sbr.rel (%p2168) target = $region88
      $region87: #{vae_forward.1} parent=75 // pred_region
        %s2171 = smul.u32 32, %s25
        %p2172 = scmp.lt.s32.totalorder %s2171, 127
        %s2173 = scalar_select %p2172, %s2171, 127
        %s2174 = smul.addr %s2173, 8
        %s2175 = scalar_lea.vmem %s12, %s2174
      $region88: #{vae_forward.1} parent=75 // pred_fallthru
        _
    $region76: #{vae_forward.1} parent=5 // pred_fallthru
      _
  $region6: #{vae_forward.1} parent=0 // loop_footer
    %s23 = sadd.s32 1, %s19
  $region7: #{vae_forward.1} parent=0 // loop_footer_branch
    %18 = sbr.rel target = $region3
  $region8: #{vae_forward.1} parent=0 // loop_exit
    _

</llo_original>
